<compile_context>
chip_gen: v5e
topology: v5e:2x2
jax: 0.10.0
libtpu: 0.0.40
codegen_flags: <defaults>
</compile_context>

<pallas_src>
import functools

import jax
import jax.numpy as jnp
from jax.experimental import pallas as pl
from jax.experimental.pallas import tpu as pltpu

BLOCK_SIZE = 32   # matches the PyTorch `block_size` buffer (tril mask size)
LN_EPS = 1e-5


def _layernorm(x, w, b):
    mu = jnp.mean(x, axis=-1, keepdims=True)
    var = jnp.mean((x - mu) ** 2, axis=-1, keepdims=True)
    return (x - mu) * jax.lax.rsqrt(var + LN_EPS) * w + b


def _block_kernel(x_ref,
                  ln1_w_ref, ln1_b_ref,
                  wqkv_ref,
                  wp_ref, bp_ref,
                  ln2_w_ref, ln2_b_ref,
                  w1_ref, b1_ref,
                  w2_ref, b2_ref,
                  out_ref,
                  *, n_head: int):
    xb = x_ref[...]                          # (Bb, T, C) f32
    Bb, T, C = xb.shape
    hs = C // n_head

    # Flatten batch rows so every matmul sees M = Bb*T (MXU-shaped).
    x = xb.reshape(Bb * T, C)

    # ---- LayerNorm 1 (f32) ----
    h1 = _layernorm(x, ln1_w_ref[0], ln1_b_ref[0])

    # ---- fused QKV projection: one wide matmul, bf16 operands, f32 accumulation.
    # The C**-0.5 attention scale is pre-folded into the q-columns of wqkv.
    qkv = jnp.dot(h1.astype(jnp.bfloat16), wqkv_ref[...],
                  preferred_element_type=jnp.float32)        # (Bb*T, 3C) f32
    q = qkv[:, :C]
    k = qkv[:, C:2 * C]
    v = qkv[:, 2 * C:]

    # ---- multi-head attention, all heads batched into one einsum pair ----
    # Cast to bf16 BEFORE the layout permute: halves the bytes moved by the
    # (B,T,H,hs)->(B,H,T,hs) relayout that competes with MXU operand loads.
    def to_heads(a):   # f32 (Bb*T, C) -> bf16 (Bb*n_head, T, hs)
        a = a.astype(jnp.bfloat16).reshape(Bb, T, n_head, hs)
        return a.transpose(0, 2, 1, 3).reshape(Bb * n_head, T, hs)

    qh, kh, vh = to_heads(q), to_heads(k), to_heads(v)

    s = jnp.einsum('bqd,bkd->bqk', qh, kh,
                   preferred_element_type=jnp.float32)       # (Bb*H, T, T) f32

    row = jax.lax.broadcasted_iota(jnp.int32, (1, T, T), 1)
    col = jax.lax.broadcasted_iota(jnp.int32, (1, T, T), 2)
    causal = row >= col                                      # (1, T, T)
    s = jnp.where(causal, s, -jnp.inf)

    # softmax (f32); reciprocal goes to the EUP slot.
    s = s - jnp.max(s, axis=-1, keepdims=True)
    p = jnp.exp(s)
    p = p * pl.reciprocal(jnp.sum(p, axis=-1, keepdims=True), approx=True)

    o = jnp.einsum('bqk,bkd->bqd', p.astype(jnp.bfloat16), vh,
                   preferred_element_type=jnp.float32)       # (Bb*H, T, hs) f32
    # bf16 cast BEFORE the head-merge permute (same halving as above).
    o = o.astype(jnp.bfloat16).reshape(Bb, n_head, T, hs)
    o = o.transpose(0, 2, 1, 3).reshape(Bb * T, C)

    sa = jnp.dot(o, wp_ref[...], preferred_element_type=jnp.float32) + bp_ref[0]
    x1 = x + sa                                              # residual 1 (f32)

    # ---- LayerNorm 2 + FeedForward (Linear -> ReLU -> Linear; dropout p=0 is id) ----
    h2 = _layernorm(x1, ln2_w_ref[0], ln2_b_ref[0])
    ff = jnp.dot(h2.astype(jnp.bfloat16), w1_ref[...],
                 preferred_element_type=jnp.float32) + b1_ref[0]
    ff = jnp.maximum(ff, 0.0)
    ff = jnp.dot(ff.astype(jnp.bfloat16), w2_ref[...],
                 preferred_element_type=jnp.float32) + b2_ref[0]

    out_ref[...] = (x1 + ff).reshape(Bb, T, C)


def prepare_block_params(params):
    """One-time weight packing (hoisted out of the per-call path):
    fuse QKV, fold the C**-0.5 scale into the q columns, cast matmul weights to bf16."""
    C = params["wq"].shape[0]
    wqkv = jnp.concatenate(
        [params["wq"] * (C ** -0.5), params["wk"], params["wv"]], axis=1
    ).astype(jnp.bfloat16)
    return {
        "ln1_w": params["ln1_w"], "ln1_b": params["ln1_b"],
        "wqkv": wqkv,
        "wp": params["wp"].astype(jnp.bfloat16), "bp": params["bp"],
        "ln2_w": params["ln2_w"], "ln2_b": params["ln2_b"],
        "w1": params["w1"].astype(jnp.bfloat16), "b1": params["b1"],
        "w2": params["w2"].astype(jnp.bfloat16), "b2": params["b2"],
    }


def _vmem_capacity_bytes():
    """Physical VMEM per TensorCore, with safe fallbacks."""
    try:
        cap = getattr(pltpu.get_tpu_info(), "vmem_capacity_bytes", None)
        if cap:
            return int(cap)
    except Exception:
        pass
    try:
        kind = jax.devices()[0].device_kind.lower()
        return (64 if "v7" in kind else 128) * 1024 * 1024
    except Exception:
        return 64 * 1024 * 1024


def _choose_b_blk(B, T, C, n_head, vmem_limit_bytes):
    """Pick batch rows per grid step: big enough to feed the MXU (M ~= 512),
    small enough to fit VMEM, and capped so the grid has >= 2 parallel steps."""
    # Resident weights (single-buffered bf16) + LN/bias f32.
    weight_bytes = 12 * C * C * 2 + 16 * C * 4
    block_budget = int(0.75 * vmem_limit_bytes) - weight_bytes
    # Conservative per-token footprint: f32 intermediates + bf16 head copies +
    # double-buffered x/out blocks + attention score rows.
    per_row = 72 * C + 16 * n_head * T + 64
    rows = max(T, block_budget // per_row) if block_budget > 0 else T
    b_vmem = max(1, rows // T)
    b_target = max(1, 512 // T)      # M = b_blk*T ~ 512 rows (multiple of 128/256)
    b_mega = max(1, B // 2)          # >= 2 grid steps -> both v7x TCs + pipelining
    return max(1, min(b_vmem, b_target, b_mega, B))


def block_forward(x, prepped, n_head, *, b_blk=None):
    """x: (B, T, C) float32.  prepped: output of prepare_block_params()."""
    B, T, C = x.shape
    assert T <= BLOCK_SIZE and C % n_head == 0
    # NOTE: for lane-dense (unmasked) stores, real configs should have C % 128 == 0;
    # smaller toy C still works because the block covers the full array dims.

    vmem_cap = _vmem_capacity_bytes()
    vmem_limit = max(32 * 1024 * 1024, vmem_cap - 16 * 1024 * 1024)

    if b_blk is None:
        b_blk = _choose_b_blk(B, T, C, n_head, vmem_limit)
    Bp = pl.cdiv(B, b_blk) * b_blk
    xp = jnp.pad(x, ((0, Bp - B), (0, 0), (0, 0))) if Bp != B else x

    # Constant-index inputs (weights, LN params, biases): DMA'd once, so keep them
    # single-buffered -- halves resident weight VMEM vs. the default double buffer.
    def full(shape):
        return pl.BlockSpec(shape, lambda b: (0,) * len(shape),
                            pipeline_mode=pl.Buffered(1))

    in_specs = [
        pl.BlockSpec((b_blk, T, C), lambda b: (b, 0, 0)),    # x (pipelined, default 2-deep)
        full((1, C)), full((1, C)),                          # ln1 w, b
        full((C, 3 * C)),                                    # Wqkv (bf16, scale folded)
        full((C, C)), full((1, C)),                          # Wproj (bf16), bproj
        full((1, C)), full((1, C)),                          # ln2 w, b
        full((C, 4 * C)), full((1, 4 * C)),                  # W1 (bf16), b1
        full((4 * C, C)), full((1, C)),                      # W2 (bf16), b2
    ]

    kernel = functools.partial(_block_kernel, n_head=n_head)

    out = pl.pallas_call(
        kernel,
        out_shape=jax.ShapeDtypeStruct((Bp, T, C), jnp.float32),
        grid_spec=pltpu.PrefetchScalarGridSpec(
            num_scalar_prefetch=0,
            grid=(Bp // b_blk,),
            in_specs=in_specs,
            out_specs=pl.BlockSpec((b_blk, T, C), lambda b: (b, 0, 0)),
        ),
        compiler_params=pltpu.CompilerParams(
            dimension_semantics=("parallel",),   # megacore: batch blocks split across TCs
            vmem_limit_bytes=vmem_limit,         # ~112 MiB on v5e/v6e, ~48 MiB on v7x
        ),
    )(xp,
      prepped["ln1_w"], prepped["ln1_b"],
      prepped["wqkv"],
      prepped["wp"], prepped["bp"],
      prepped["ln2_w"], prepped["ln2_b"],
      prepped["w1"], prepped["b1"],
      prepped["w2"], prepped["b2"])

    return out[:B] if Bp != B else out


def block_reference(x, params, n_head):
    """Pure-JAX f32 reference mirroring the PyTorch module."""
    B, T, C = x.shape
    hs = C // n_head

    def ln(z, w, b):
        mu = jnp.mean(z, axis=-1, keepdims=True)
        var = jnp.mean((z - mu) ** 2, axis=-1, keepdims=True)
        return (z - mu) * jax.lax.rsqrt(var + LN_EPS) * w[0] + b[0]

    h1 = ln(x, params["ln1_w"], params["ln1_b"])
    q = h1 @ params["wq"]
    k = h1 @ params["wk"]
    v = h1 @ params["wv"]
    mask = jnp.tril(jnp.ones((T, T), bool))
    outs = []
    for h in range(n_head):
        qh, kh, vh = (a[..., h * hs:(h + 1) * hs] for a in (q, k, v))
        wei = jnp.einsum("btd,bsd->bts", qh, kh) * (C ** -0.5)
        wei = jnp.where(mask, wei, -jnp.inf)
        wei = jax.nn.softmax(wei, axis=-1)
        outs.append(jnp.einsum("bts,bsd->btd", wei, vh))
    sa = jnp.concatenate(outs, axis=-1) @ params["wp"] + params["bp"][0]
    x1 = x + sa
    h2 = ln(x1, params["ln2_w"], params["ln2_b"])
    ff = jnp.maximum(h2 @ params["w1"] + params["b1"][0], 0.0)
    ff = ff @ params["w2"] + params["b2"][0]
    return x1 + ff


def init_params(key, n_embd, n_head):
    C = n_embd
    keys = jax.random.split(key, 8)
    s = 0.02
    return {
        "ln1_w": jnp.ones((1, C), jnp.float32),
        "ln1_b": jnp.zeros((1, C), jnp.float32),
        # Per-head key/query/value weights concatenated along the output dim,
        # stored (in, out) so the kernel does x @ W.
        "wq": s * jax.random.normal(keys[0], (C, C), jnp.float32),
        "wk": s * jax.random.normal(keys[1], (C, C), jnp.float32),
        "wv": s * jax.random.normal(keys[2], (C, C), jnp.float32),
        "wp": s * jax.random.normal(keys[3], (C, C), jnp.float32),
        "bp": s * jax.random.normal(keys[4], (1, C), jnp.float32),
        "ln2_w": jnp.ones((1, C), jnp.float32),
        "ln2_b": jnp.zeros((1, C), jnp.float32),
        "w1": s * jax.random.normal(keys[5], (C, 4 * C), jnp.float32),
        "b1": s * jax.random.normal(keys[6], (1, 4 * C), jnp.float32),
        "w2": s * jax.random.normal(keys[7], (4 * C, C), jnp.float32),
        "b2": jnp.zeros((1, C), jnp.float32),
    }


if __name__ == "__main__":
    B, T, n_embd, n_head = 2, 8, 32, 4

    key = jax.random.PRNGKey(0)
    kx, kp = jax.random.split(key)
    x = jax.random.normal(kx, (B, T, n_embd), jnp.float32)
    params = init_params(kp, n_embd, n_head)

    # Weight packing is hoisted out of the per-call path (done once).
    prepped = prepare_block_params(params)

    out = block_forward(x, prepped, n_head)
    out = jax.block_until_ready(out)

    ref = block_reference(x, params, n_head)
    assert out.shape == (B, T, n_embd)
    # bf16 matmul operands + approx reciprocal -> loosened tolerance vs f32 reference.
    err = jnp.max(jnp.abs(out - ref))
    assert jnp.allclose(out, ref, atol=2e-2, rtol=2e-2), f"max err {err}"

    print("KERNEL_OK")
</pallas_src>

<mosaic_0001>
module attributes {stable_mosaic.version = 11 : i64} {
  func.func @_block_kernel(%arg0: i32, %arg1: memref<1x8x32xf32, #tpu.memory_space<vmem>>, %arg2: memref<1x32xf32, #tpu.memory_space<vmem>>, %arg3: memref<1x32xf32, #tpu.memory_space<vmem>>, %arg4: memref<32x96xbf16, #tpu.memory_space<vmem>>, %arg5: memref<32x32xbf16, #tpu.memory_space<vmem>>, %arg6: memref<1x32xf32, #tpu.memory_space<vmem>>, %arg7: memref<1x32xf32, #tpu.memory_space<vmem>>, %arg8: memref<1x32xf32, #tpu.memory_space<vmem>>, %arg9: memref<32x128xbf16, #tpu.memory_space<vmem>>, %arg10: memref<1x128xf32, #tpu.memory_space<vmem>>, %arg11: memref<128x32xbf16, #tpu.memory_space<vmem>>, %arg12: memref<1x32xf32, #tpu.memory_space<vmem>>, %arg13: memref<1x8x32xf32, #tpu.memory_space<vmem>>) attributes {dimension_semantics = [#tpu.dimension_semantics<parallel>], iteration_bounds = array<i64: 2>, scalar_prefetch = 0 : i64, scratch_operands = 0 : i64, tpu.core_type = #tpu.core_type<tc>, window_params = [{transform_indices = @transform_0, window_bounds = array<i64: 1, 8, 32>}, {pipeline_mode = #tpu.pipeline_mode<synchronous>, transform_indices = @transform_1, window_bounds = array<i64: 1, 32>}, {pipeline_mode = #tpu.pipeline_mode<synchronous>, transform_indices = @transform_2, window_bounds = array<i64: 1, 32>}, {pipeline_mode = #tpu.pipeline_mode<synchronous>, transform_indices = @transform_3, window_bounds = array<i64: 32, 96>}, {pipeline_mode = #tpu.pipeline_mode<synchronous>, transform_indices = @transform_4, window_bounds = array<i64: 32, 32>}, {pipeline_mode = #tpu.pipeline_mode<synchronous>, transform_indices = @transform_5, window_bounds = array<i64: 1, 32>}, {pipeline_mode = #tpu.pipeline_mode<synchronous>, transform_indices = @transform_6, window_bounds = array<i64: 1, 32>}, {pipeline_mode = #tpu.pipeline_mode<synchronous>, transform_indices = @transform_7, window_bounds = array<i64: 1, 32>}, {pipeline_mode = #tpu.pipeline_mode<synchronous>, transform_indices = @transform_8, window_bounds = array<i64: 32, 128>}, {pipeline_mode = #tpu.pipeline_mode<synchronous>, transform_indices = @transform_9, window_bounds = array<i64: 1, 128>}, {pipeline_mode = #tpu.pipeline_mode<synchronous>, transform_indices = @transform_10, window_bounds = array<i64: 128, 32>}, {pipeline_mode = #tpu.pipeline_mode<synchronous>, transform_indices = @transform_11, window_bounds = array<i64: 1, 32>}, {transform_indices = @transform_12, window_bounds = array<i64: 1, 8, 32>}]} {
    %c0 = arith.constant 0 : index
    %c0_0 = arith.constant 0 : index
    %c0_1 = arith.constant 0 : index
    %0 = vector.load %arg1[%c0, %c0_0, %c0_1] : memref<1x8x32xf32, #tpu.memory_space<vmem>>, vector<1x8x32xf32>
    %1 = vector.shape_cast %0 : vector<1x8x32xf32> to vector<8x32xf32>
    %c0_2 = arith.constant 0 : index
    %c0_3 = arith.constant 0 : index
    %2 = vector.load %arg2[%c0_2, %c0_3] : memref<1x32xf32, #tpu.memory_space<vmem>>, vector<1x32xf32>
    %3 = vector.shape_cast %2 : vector<1x32xf32> to vector<32xf32>
    %c0_4 = arith.constant 0 : index
    %c0_5 = arith.constant 0 : index
    %4 = vector.load %arg3[%c0_4, %c0_5] : memref<1x32xf32, #tpu.memory_space<vmem>>, vector<1x32xf32>
    %5 = vector.shape_cast %4 : vector<1x32xf32> to vector<32xf32>
    %cst = arith.constant dense<0.000000e+00> : vector<8xf32>
    %6 = vector.multi_reduction <add>, %1, %cst [1] : vector<8x32xf32> to vector<8xf32>
    %7 = vector.shape_cast %6 : vector<8xf32> to vector<8x1xf32>
    %cst_6 = arith.constant 3.200000e+01 : f32
    %8 = vector.broadcast %cst_6 : f32 to vector<8x1xf32>
    %9 = arith.divf %7, %8 : vector<8x1xf32>
    %10 = vector.broadcast %9 : vector<8x1xf32> to vector<8x32xf32>
    %11 = arith.subf %1, %10 : vector<8x32xf32>
    %12 = arith.mulf %11, %11 : vector<8x32xf32>
    %cst_7 = arith.constant dense<0.000000e+00> : vector<8xf32>
    %13 = vector.multi_reduction <add>, %12, %cst_7 [1] : vector<8x32xf32> to vector<8xf32>
    %14 = vector.shape_cast %13 : vector<8xf32> to vector<8x1xf32>
    %cst_8 = arith.constant 3.200000e+01 : f32
    %15 = vector.broadcast %cst_8 : f32 to vector<8x1xf32>
    %16 = arith.divf %14, %15 : vector<8x1xf32>
    %17 = vector.broadcast %9 : vector<8x1xf32> to vector<8x32xf32>
    %18 = arith.subf %1, %17 : vector<8x32xf32>
    %cst_9 = arith.constant 9.99999974E-6 : f32
    %19 = vector.broadcast %cst_9 : f32 to vector<8x1xf32>
    %20 = arith.addf %16, %19 : vector<8x1xf32>
    %21 = math.rsqrt %20 : vector<8x1xf32>
    %22 = vector.broadcast %21 : vector<8x1xf32> to vector<8x32xf32>
    %23 = arith.mulf %18, %22 : vector<8x32xf32>
    %24 = vector.shape_cast %3 : vector<32xf32> to vector<1x32xf32>
    %25 = vector.broadcast %24 : vector<1x32xf32> to vector<8x32xf32>
    %26 = arith.mulf %23, %25 : vector<8x32xf32>
    %27 = vector.shape_cast %5 : vector<32xf32> to vector<1x32xf32>
    %28 = vector.broadcast %27 : vector<1x32xf32> to vector<8x32xf32>
    %29 = arith.addf %26, %28 : vector<8x32xf32>
    %30 = arith.truncf %29 : vector<8x32xf32> to vector<8x32xbf16>
    %c0_10 = arith.constant 0 : index
    %c0_11 = arith.constant 0 : index
    %31 = vector.load %arg4[%c0_10, %c0_11] : memref<32x96xbf16, #tpu.memory_space<vmem>>, vector<32x96xbf16>
    %cst_12 = arith.constant dense<0.000000e+00> : vector<8x96xf32>
    %32 = tpu.matmul %30, %31, %cst_12 {dimension_numbers = #tpu.dot_dimension_numbers<[1], [0], [0], [1], [0, 0, 1, 1], [], []>} : vector<8x32xbf16>, vector<32x96xbf16>, vector<8x96xf32> -> vector<8x96xf32>
    %33 = vector.extract_strided_slice %32 {offsets = [0, 0], sizes = [8, 32], strides = [1, 1]} : vector<8x96xf32> to vector<8x32xf32>
    %34 = vector.extract_strided_slice %32 {offsets = [0, 32], sizes = [8, 32], strides = [1, 1]} : vector<8x96xf32> to vector<8x32xf32>
    %35 = vector.extract_strided_slice %32 {offsets = [0, 64], sizes = [8, 32], strides = [1, 1]} : vector<8x96xf32> to vector<8x32xf32>
    %36 = arith.truncf %33 : vector<8x32xf32> to vector<8x32xbf16>
    %37 = vector.shape_cast %36 : vector<8x32xbf16> to vector<1x8x4x8xbf16>
    %38 = tpu.transpose %37, [0, 2, 1, 3] : vector<1x8x4x8xbf16> -> vector<1x4x8x8xbf16>
    %39 = vector.shape_cast %38 : vector<1x4x8x8xbf16> to vector<4x8x8xbf16>
    %40 = arith.truncf %34 : vector<8x32xf32> to vector<8x32xbf16>
    %41 = vector.shape_cast %40 : vector<8x32xbf16> to vector<1x8x4x8xbf16>
    %42 = tpu.transpose %41, [0, 2, 1, 3] : vector<1x8x4x8xbf16> -> vector<1x4x8x8xbf16>
    %43 = vector.shape_cast %42 : vector<1x4x8x8xbf16> to vector<4x8x8xbf16>
    %44 = arith.truncf %35 : vector<8x32xf32> to vector<8x32xbf16>
    %45 = vector.shape_cast %44 : vector<8x32xbf16> to vector<1x8x4x8xbf16>
    %46 = tpu.transpose %45, [0, 2, 1, 3] : vector<1x8x4x8xbf16> -> vector<1x4x8x8xbf16>
    %47 = vector.shape_cast %46 : vector<1x4x8x8xbf16> to vector<4x8x8xbf16>
    "tpu.trace_start"() <{level = 10 : i32, message = "bqd,bkd->bqk"}> : () -> ()
    %cst_13 = arith.constant dense<0.000000e+00> : vector<4x8x8xf32>
    %48 = tpu.matmul %39, %43, %cst_13 {dimension_numbers = #tpu.dot_dimension_numbers<[2], [2], [1], [1], [0, 0, 0, 1, 1, 1], [0], [0]>} : vector<4x8x8xbf16>, vector<4x8x8xbf16>, vector<4x8x8xf32> -> vector<4x8x8xf32>
    "tpu.trace_stop"() : () -> ()
    %49 = tpu.iota {dimensions = array<i32: 1>} : vector<1x8x8xi32>
    %50 = tpu.iota {dimensions = array<i32: 2>} : vector<1x8x8xi32>
    %51 = arith.cmpi sge, %49, %50 : vector<1x8x8xi32>
    %cst_14 = arith.constant 0xFF800000 : f32
    %52 = vector.shape_cast %51 : vector<1x8x8xi1> to vector<1x8x8xi1>
    %53 = vector.broadcast %52 : vector<1x8x8xi1> to vector<4x8x8xi1>
    %54 = vector.broadcast %cst_14 : f32 to vector<4x8x8xf32>
    %55 = arith.select %53, %48, %54 : vector<4x8x8xi1>, vector<4x8x8xf32>
    %cst_15 = arith.constant dense<0xFF800000> : vector<4x8xf32>
    %56 = vector.multi_reduction <maximumf>, %55, %cst_15 [2] : vector<4x8x8xf32> to vector<4x8xf32>
    %57 = vector.shape_cast %56 : vector<4x8xf32> to vector<4x8x1xf32>
    %58 = vector.broadcast %57 : vector<4x8x1xf32> to vector<4x8x8xf32>
    %59 = arith.subf %55, %58 : vector<4x8x8xf32>
    %60 = math.exp %59 : vector<4x8x8xf32>
    %cst_16 = arith.constant dense<0.000000e+00> : vector<4x8xf32>
    %61 = vector.multi_reduction <add>, %60, %cst_16 [2] : vector<4x8x8xf32> to vector<4x8xf32>
    %62 = vector.shape_cast %61 : vector<4x8xf32> to vector<4x8x1xf32>
    %63 = tpu.reciprocal %62 {approx = true} : vector<4x8x1xf32> -> vector<4x8x1xf32>
    %64 = vector.broadcast %63 : vector<4x8x1xf32> to vector<4x8x8xf32>
    %65 = arith.mulf %60, %64 : vector<4x8x8xf32>
    %66 = arith.truncf %65 : vector<4x8x8xf32> to vector<4x8x8xbf16>
    "tpu.trace_start"() <{level = 10 : i32, message = "bqk,bkd->bqd"}> : () -> ()
    %cst_17 = arith.constant dense<0.000000e+00> : vector<4x8x8xf32>
    %67 = tpu.matmul %66, %47, %cst_17 {dimension_numbers = #tpu.dot_dimension_numbers<[2], [1], [1], [2], [0, 0, 0, 1, 1, 2], [0], [0]>} : vector<4x8x8xbf16>, vector<4x8x8xbf16>, vector<4x8x8xf32> -> vector<4x8x8xf32>
    "tpu.trace_stop"() : () -> ()
    %68 = arith.truncf %67 : vector<4x8x8xf32> to vector<4x8x8xbf16>
    %69 = vector.shape_cast %68 : vector<4x8x8xbf16> to vector<1x4x8x8xbf16>
    %70 = tpu.transpose %69, [0, 2, 1, 3] : vector<1x4x8x8xbf16> -> vector<1x8x4x8xbf16>
    %71 = vector.shape_cast %70 : vector<1x8x4x8xbf16> to vector<8x32xbf16>
    %c0_18 = arith.constant 0 : index
    %c0_19 = arith.constant 0 : index
    %72 = vector.load %arg5[%c0_18, %c0_19] : memref<32x32xbf16, #tpu.memory_space<vmem>>, vector<32x32xbf16>
    %cst_20 = arith.constant dense<0.000000e+00> : vector<8x32xf32>
    %73 = tpu.matmul %71, %72, %cst_20 {dimension_numbers = #tpu.dot_dimension_numbers<[1], [0], [0], [1], [0, 0, 1, 1], [], []>} : vector<8x32xbf16>, vector<32x32xbf16>, vector<8x32xf32> -> vector<8x32xf32>
    %c0_21 = arith.constant 0 : index
    %c0_22 = arith.constant 0 : index
    %74 = vector.load %arg6[%c0_21, %c0_22] : memref<1x32xf32, #tpu.memory_space<vmem>>, vector<1x32xf32>
    %75 = vector.shape_cast %74 : vector<1x32xf32> to vector<32xf32>
    %76 = vector.shape_cast %75 : vector<32xf32> to vector<1x32xf32>
    %77 = vector.broadcast %76 : vector<1x32xf32> to vector<8x32xf32>
    %78 = arith.addf %73, %77 : vector<8x32xf32>
    %79 = arith.addf %1, %78 : vector<8x32xf32>
    %c0_23 = arith.constant 0 : index
    %c0_24 = arith.constant 0 : index
    %80 = vector.load %arg7[%c0_23, %c0_24] : memref<1x32xf32, #tpu.memory_space<vmem>>, vector<1x32xf32>
    %81 = vector.shape_cast %80 : vector<1x32xf32> to vector<32xf32>
    %c0_25 = arith.constant 0 : index
    %c0_26 = arith.constant 0 : index
    %82 = vector.load %arg8[%c0_25, %c0_26] : memref<1x32xf32, #tpu.memory_space<vmem>>, vector<1x32xf32>
    %83 = vector.shape_cast %82 : vector<1x32xf32> to vector<32xf32>
    %cst_27 = arith.constant dense<0.000000e+00> : vector<8xf32>
    %84 = vector.multi_reduction <add>, %79, %cst_27 [1] : vector<8x32xf32> to vector<8xf32>
    %85 = vector.shape_cast %84 : vector<8xf32> to vector<8x1xf32>
    %cst_28 = arith.constant 3.200000e+01 : f32
    %86 = vector.broadcast %cst_28 : f32 to vector<8x1xf32>
    %87 = arith.divf %85, %86 : vector<8x1xf32>
    %88 = vector.broadcast %87 : vector<8x1xf32> to vector<8x32xf32>
    %89 = arith.subf %79, %88 : vector<8x32xf32>
    %90 = arith.mulf %89, %89 : vector<8x32xf32>
    %cst_29 = arith.constant dense<0.000000e+00> : vector<8xf32>
    %91 = vector.multi_reduction <add>, %90, %cst_29 [1] : vector<8x32xf32> to vector<8xf32>
    %92 = vector.shape_cast %91 : vector<8xf32> to vector<8x1xf32>
    %cst_30 = arith.constant 3.200000e+01 : f32
    %93 = vector.broadcast %cst_30 : f32 to vector<8x1xf32>
    %94 = arith.divf %92, %93 : vector<8x1xf32>
    %95 = vector.broadcast %87 : vector<8x1xf32> to vector<8x32xf32>
    %96 = arith.subf %79, %95 : vector<8x32xf32>
    %cst_31 = arith.constant 9.99999974E-6 : f32
    %97 = vector.broadcast %cst_31 : f32 to vector<8x1xf32>
    %98 = arith.addf %94, %97 : vector<8x1xf32>
    %99 = math.rsqrt %98 : vector<8x1xf32>
    %100 = vector.broadcast %99 : vector<8x1xf32> to vector<8x32xf32>
    %101 = arith.mulf %96, %100 : vector<8x32xf32>
    %102 = vector.shape_cast %81 : vector<32xf32> to vector<1x32xf32>
    %103 = vector.broadcast %102 : vector<1x32xf32> to vector<8x32xf32>
    %104 = arith.mulf %101, %103 : vector<8x32xf32>
    %105 = vector.shape_cast %83 : vector<32xf32> to vector<1x32xf32>
    %106 = vector.broadcast %105 : vector<1x32xf32> to vector<8x32xf32>
    %107 = arith.addf %104, %106 : vector<8x32xf32>
    %108 = arith.truncf %107 : vector<8x32xf32> to vector<8x32xbf16>
    %c0_32 = arith.constant 0 : index
    %c0_33 = arith.constant 0 : index
    %109 = vector.load %arg9[%c0_32, %c0_33] : memref<32x128xbf16, #tpu.memory_space<vmem>>, vector<32x128xbf16>
    %cst_34 = arith.constant dense<0.000000e+00> : vector<8x128xf32>
    %110 = tpu.matmul %108, %109, %cst_34 {dimension_numbers = #tpu.dot_dimension_numbers<[1], [0], [0], [1], [0, 0, 1, 1], [], []>} : vector<8x32xbf16>, vector<32x128xbf16>, vector<8x128xf32> -> vector<8x128xf32>
    %c0_35 = arith.constant 0 : index
    %c0_36 = arith.constant 0 : index
    %111 = vector.load %arg10[%c0_35, %c0_36] : memref<1x128xf32, #tpu.memory_space<vmem>>, vector<1x128xf32>
    %112 = vector.shape_cast %111 : vector<1x128xf32> to vector<128xf32>
    %113 = vector.shape_cast %112 : vector<128xf32> to vector<1x128xf32>
    %114 = vector.broadcast %113 : vector<1x128xf32> to vector<8x128xf32>
    %115 = arith.addf %110, %114 : vector<8x128xf32>
    %cst_37 = arith.constant 0.000000e+00 : f32
    %116 = vector.broadcast %cst_37 : f32 to vector<8x128xf32>
    %117 = arith.maximumf %115, %116 : vector<8x128xf32>
    %118 = arith.truncf %117 : vector<8x128xf32> to vector<8x128xbf16>
    %c0_38 = arith.constant 0 : index
    %c0_39 = arith.constant 0 : index
    %119 = vector.load %arg11[%c0_38, %c0_39] : memref<128x32xbf16, #tpu.memory_space<vmem>>, vector<128x32xbf16>
    %cst_40 = arith.constant dense<0.000000e+00> : vector<8x32xf32>
    %120 = tpu.matmul %118, %119, %cst_40 {dimension_numbers = #tpu.dot_dimension_numbers<[1], [0], [0], [1], [0, 0, 1, 1], [], []>} : vector<8x128xbf16>, vector<128x32xbf16>, vector<8x32xf32> -> vector<8x32xf32>
    %c0_41 = arith.constant 0 : index
    %c0_42 = arith.constant 0 : index
    %121 = vector.load %arg12[%c0_41, %c0_42] : memref<1x32xf32, #tpu.memory_space<vmem>>, vector<1x32xf32>
    %122 = vector.shape_cast %121 : vector<1x32xf32> to vector<32xf32>
    %123 = vector.shape_cast %122 : vector<32xf32> to vector<1x32xf32>
    %124 = vector.broadcast %123 : vector<1x32xf32> to vector<8x32xf32>
    %125 = arith.addf %120, %124 : vector<8x32xf32>
    %126 = arith.addf %79, %125 : vector<8x32xf32>
    %127 = vector.shape_cast %126 : vector<8x32xf32> to vector<1x8x32xf32>
    %c0_43 = arith.constant 0 : index
    %c0_44 = arith.constant 0 : index
    %c0_45 = arith.constant 0 : index
    %128 = vector.load %arg13[%c0_43, %c0_44, %c0_45] : memref<1x8x32xf32, #tpu.memory_space<vmem>>, vector<1x8x32xf32>
    tpu.vector_store %arg13[%c0_43, %c0_44, %c0_45], %127 {strides = array<i32>} : memref<1x8x32xf32, #tpu.memory_space<vmem>>, vector<1x8x32xf32>,
    return
  }
  func.func @transform_0(%arg0: i32) -> (i32, i32, i32) {
    %c0_i32 = arith.constant 0 : i32
    %c0_i32_0 = arith.constant 0 : i32
    %c0_i32_1 = arith.constant 0 : i32
    return %arg0, %c0_i32, %c0_i32_0 : i32, i32, i32
  }
  func.func @transform_1(%arg0: i32) -> (i32, i32) {
    %c0_i32 = arith.constant 0 : i32
    %c0_i32_0 = arith.constant 0 : i32
    %c0_i32_1 = arith.constant 0 : i32
    return %c0_i32, %c0_i32_0 : i32, i32
  }
  func.func @transform_2(%arg0: i32) -> (i32, i32) {
    %c0_i32 = arith.constant 0 : i32
    %c0_i32_0 = arith.constant 0 : i32
    %c0_i32_1 = arith.constant 0 : i32
    return %c0_i32, %c0_i32_0 : i32, i32
  }
  func.func @transform_3(%arg0: i32) -> (i32, i32) {
    %c0_i32 = arith.constant 0 : i32
    %c0_i32_0 = arith.constant 0 : i32
    %c0_i32_1 = arith.constant 0 : i32
    return %c0_i32, %c0_i32_0 : i32, i32
  }
  func.func @transform_4(%arg0: i32) -> (i32, i32) {
    %c0_i32 = arith.constant 0 : i32
    %c0_i32_0 = arith.constant 0 : i32
    %c0_i32_1 = arith.constant 0 : i32
    return %c0_i32, %c0_i32_0 : i32, i32
  }
  func.func @transform_5(%arg0: i32) -> (i32, i32) {
    %c0_i32 = arith.constant 0 : i32
    %c0_i32_0 = arith.constant 0 : i32
    %c0_i32_1 = arith.constant 0 : i32
    return %c0_i32, %c0_i32_0 : i32, i32
  }
  func.func @transform_6(%arg0: i32) -> (i32, i32) {
    %c0_i32 = arith.constant 0 : i32
    %c0_i32_0 = arith.constant 0 : i32
    %c0_i32_1 = arith.constant 0 : i32
    return %c0_i32, %c0_i32_0 : i32, i32
  }
  func.func @transform_7(%arg0: i32) -> (i32, i32) {
    %c0_i32 = arith.constant 0 : i32
    %c0_i32_0 = arith.constant 0 : i32
    %c0_i32_1 = arith.constant 0 : i32
    return %c0_i32, %c0_i32_0 : i32, i32
  }
  func.func @transform_8(%arg0: i32) -> (i32, i32) {
    %c0_i32 = arith.constant 0 : i32
    %c0_i32_0 = arith.constant 0 : i32
    %c0_i32_1 = arith.constant 0 : i32
    return %c0_i32, %c0_i32_0 : i32, i32
  }
  func.func @transform_9(%arg0: i32) -> (i32, i32) {
    %c0_i32 = arith.constant 0 : i32
    %c0_i32_0 = arith.constant 0 : i32
    %c0_i32_1 = arith.constant 0 : i32
    return %c0_i32, %c0_i32_0 : i32, i32
  }
  func.func @transform_10(%arg0: i32) -> (i32, i32) {
    %c0_i32 = arith.constant 0 : i32
    %c0_i32_0 = arith.constant 0 : i32
    %c0_i32_1 = arith.constant 0 : i32
    return %c0_i32, %c0_i32_0 : i32, i32
  }
  func.func @transform_11(%arg0: i32) -> (i32, i32) {
    %c0_i32 = arith.constant 0 : i32
    %c0_i32_0 = arith.constant 0 : i32
    %c0_i32_1 = arith.constant 0 : i32
    return %c0_i32, %c0_i32_0 : i32, i32
  }
  func.func @transform_12(%arg0: i32) -> (i32, i32, i32) {
    %c0_i32 = arith.constant 0 : i32
    %c0_i32_0 = arith.constant 0 : i32
    %c0_i32_1 = arith.constant 0 : i32
    return %arg0, %c0_i32, %c0_i32_0 : i32, i32, i32
  }
}

</mosaic_0001>

<llo_original>
// kernel: tpu_custom_call.1
$region0: #{tpu_custom_call.1}
  #allocation0 [shape = 'u32[]', space=smem, size = 0x4, offset = 0x4, fixed_abs, tag = 'smem constant byte address 0x4 - core index']
  #allocation1 [shape = 'u32[72,128]{1,0:T(1,128)}', space=vmem, size = 0x9000, scoped, tag = 'internal scratch']
  %s0 = inlined_call_operand.vmem [shape: f32[2,8,32], index: 0, kind: input, shape index: {}]
  %s1 = inlined_call_operand.vmem [shape: f32[1,32], index: 1, kind: input, shape index: {}]
  %s2 = inlined_call_operand.vmem [shape: f32[1,32], index: 2, kind: input, shape index: {}]
  %s3 = inlined_call_operand.vmem [shape: bf16[32,96], index: 3, kind: input, shape index: {}]
  %s4 = inlined_call_operand.vmem [shape: bf16[32,32], index: 4, kind: input, shape index: {}]
  %s5 = inlined_call_operand.vmem [shape: f32[1,32], index: 5, kind: input, shape index: {}]
  %s6 = inlined_call_operand.vmem [shape: f32[1,32], index: 6, kind: input, shape index: {}]
  %s7 = inlined_call_operand.vmem [shape: f32[1,32], index: 7, kind: input, shape index: {}]
  %s8 = inlined_call_operand.vmem [shape: bf16[32,128], index: 8, kind: input, shape index: {}]
  %s9 = inlined_call_operand.vmem [shape: f32[1,128], index: 9, kind: input, shape index: {}]
  %s10 = inlined_call_operand.vmem [shape: bf16[128,32], index: 10, kind: input, shape index: {}]
  %s11 = inlined_call_operand.vmem [shape: f32[1,32], index: 11, kind: input, shape index: {}]
  %s12 = inlined_call_operand.hbm [shape: f32[2,8,32], index: 12, kind: output, shape index: {}]
  %s13 = sld [smem:[#allocation0]]
  $region81: #{tpu_custom_call.1} parent=0
    _
  %s15 = ssub.s32 1, %s13
  %s16 = scalar_select 0, %s15, %s13
  $region1: #{tpu_custom_call.1} parent=0
    #allocation2 [shape = 'u8[8192]{0}', space=vmem, size = 0x2000, scoped, tag = 'output window, operand 0']
    #allocation3 [shape = 's32[2]{0}', space=sflag, size = 0x8, scoped, tag = 'scoped memory for tpu_custom_call.1']
    %17 = vsyncpa [#allocation3], 0
    %s18 = scalar_lea.sflag [#allocation3], 1
    %19 = vsyncpa %s18, 0
    loop: start=0, step=1, limit=4
    $region2: #{tpu_custom_call.1} parent=1 // loop_pre_header
      _
    $region3: #{tpu_custom_call.1} parent=1 // loop_header
      %s21 = sphi 0, %s25
      %p22 = scmp.ge.s32.totalorder %s21, 4
      %s31 = sphi 0, %s33
      %s34 = sphi 0, %s31
      %s35 = sphi 0, %s34
      %s51 = sphi 0, %s35
      %s55 = sphi 0, %s55
      %s57 = sphi 0, %s55
      %s58 = sphi 0, %s57
      %s72 = sphi 0, %s58
      %s76 = sphi 0, %s76
      %s78 = sphi 0, %s76
      %s79 = sphi 0, %s78
      %s93 = sphi 0, %s79
      %s97 = sphi 0, %s97
      %s99 = sphi 0, %s97
      %s100 = sphi 0, %s99
      %s114 = sphi 0, %s100
      %s118 = sphi 0, %s118
      %s120 = sphi 0, %s118
      %s121 = sphi 0, %s120
      %s135 = sphi 0, %s121
      %s139 = sphi 0, %s139
      %s141 = sphi 0, %s139
      %s142 = sphi 0, %s141
      %s156 = sphi 0, %s142
      %s160 = sphi 0, %s160
      %s162 = sphi 0, %s160
      %s163 = sphi 0, %s162
      %s177 = sphi 0, %s163
      %s181 = sphi 0, %s181
      %s183 = sphi 0, %s181
      %s184 = sphi 0, %s183
      %s198 = sphi 0, %s184
      %s202 = sphi 0, %s202
      %s204 = sphi 0, %s202
      %s205 = sphi 0, %s204
      %s219 = sphi 0, %s205
      %s223 = sphi 0, %s223
      %s225 = sphi 0, %s223
      %s226 = sphi 0, %s225
      %s240 = sphi 0, %s226
      %s244 = sphi 0, %s244
      %s246 = sphi 0, %s244
      %s247 = sphi 0, %s246
      %s261 = sphi 0, %s247
      %s265 = sphi 0, %s265
      %s267 = sphi 0, %s265
      %s268 = sphi 0, %s267
      %s282 = sphi 0, %s268
      %s288 = sphi 0, %s290
      %s291 = sphi 0, %s288
      %s292 = sphi 0, %s291
      %s308 = sphi 0, %s292
    $region4: #{tpu_custom_call.1} parent=1 // loop_header_branch
      %24 = sbr.rel (%p22) target = $region8
    $region5: #{tpu_custom_call.1} parent=1 // loop_body
      %s26 = ssub.s32 %s21, 1
      %s27 = ssub.s32 %s21, 2
      %s28 = sadd.s32 %s21, 1
      %s29 = ssub.s32 %s21, %s28
      %p30 = scmp.eq.s32.totalorder %s29, 0
      %s32 = sadd.s32 %s31, 1
      %s33 = scalar_select %p30, %s31, %s32
      %p36 = pneg %p30
      %p37 = scmp.eq.s32.totalorder %s21, 1
      %p38 = por %p36, %p37
      %p39 = scmp.ne.s32.totalorder %s31, %s34
      %p40 = scmp.eq.s32.totalorder %s21, 0
      %p41 = por %p39, %p40
      %p42 = scmp.ne.s32.totalorder %s31, %s34
      %p43 = scmp.eq.s32.totalorder %s26, 1
      %p44 = por %p42, %p43
      %p45 = scmp.ne.s32.totalorder %s34, %s35
      %p46 = scmp.eq.s32.totalorder %s26, 0
      %p47 = por %p45, %p46
      %p48 = scmp.ne.s32.totalorder %s34, %s35
      %p49 = scmp.eq.s32.totalorder %s27, 1
      %p50 = por %p48, %p49
      %p52 = scmp.ne.s32.totalorder %s35, %s51
      %p53 = scmp.eq.s32.totalorder %s27, 0
      %p54 = por %p52, %p53
      %s56 = sadd.s32 %s55, 1
      %p59 = scmp.eq.s32.totalorder %s21, 1
      %p60 = scmp.ne.s32.totalorder %s55, %s57
      %p61 = scmp.eq.s32.totalorder %s21, 0
      %p62 = por %p60, %p61
      %p63 = scmp.ne.s32.totalorder %s55, %s57
      %p64 = scmp.eq.s32.totalorder %s26, 1
      %p65 = por %p63, %p64
      %p66 = scmp.ne.s32.totalorder %s57, %s58
      %p67 = scmp.eq.s32.totalorder %s26, 0
      %p68 = por %p66, %p67
      %p69 = scmp.ne.s32.totalorder %s57, %s58
      %p70 = scmp.eq.s32.totalorder %s27, 1
      %p71 = por %p69, %p70
      %p73 = scmp.ne.s32.totalorder %s58, %s72
      %p74 = scmp.eq.s32.totalorder %s27, 0
      %p75 = por %p73, %p74
      %s77 = sadd.s32 %s76, 1
      %p80 = scmp.eq.s32.totalorder %s21, 1
      %p81 = scmp.ne.s32.totalorder %s76, %s78
      %p82 = scmp.eq.s32.totalorder %s21, 0
      %p83 = por %p81, %p82
      %p84 = scmp.ne.s32.totalorder %s76, %s78
      %p85 = scmp.eq.s32.totalorder %s26, 1
      %p86 = por %p84, %p85
      %p87 = scmp.ne.s32.totalorder %s78, %s79
      %p88 = scmp.eq.s32.totalorder %s26, 0
      %p89 = por %p87, %p88
      %p90 = scmp.ne.s32.totalorder %s78, %s79
      %p91 = scmp.eq.s32.totalorder %s27, 1
      %p92 = por %p90, %p91
      %p94 = scmp.ne.s32.totalorder %s79, %s93
      %p95 = scmp.eq.s32.totalorder %s27, 0
      %p96 = por %p94, %p95
      %s98 = sadd.s32 %s97, 1
      %p101 = scmp.eq.s32.totalorder %s21, 1
      %p102 = scmp.ne.s32.totalorder %s97, %s99
      %p103 = scmp.eq.s32.totalorder %s21, 0
      %p104 = por %p102, %p103
      %p105 = scmp.ne.s32.totalorder %s97, %s99
      %p106 = scmp.eq.s32.totalorder %s26, 1
      %p107 = por %p105, %p106
      %p108 = scmp.ne.s32.totalorder %s99, %s100
      %p109 = scmp.eq.s32.totalorder %s26, 0
      %p110 = por %p108, %p109
      %p111 = scmp.ne.s32.totalorder %s99, %s100
      %p112 = scmp.eq.s32.totalorder %s27, 1
      %p113 = por %p111, %p112
      %p115 = scmp.ne.s32.totalorder %s100, %s114
      %p116 = scmp.eq.s32.totalorder %s27, 0
      %p117 = por %p115, %p116
      %s119 = sadd.s32 %s118, 1
      %p122 = scmp.eq.s32.totalorder %s21, 1
      %p123 = scmp.ne.s32.totalorder %s118, %s120
      %p124 = scmp.eq.s32.totalorder %s21, 0
      %p125 = por %p123, %p124
      %p126 = scmp.ne.s32.totalorder %s118, %s120
      %p127 = scmp.eq.s32.totalorder %s26, 1
      %p128 = por %p126, %p127
      %p129 = scmp.ne.s32.totalorder %s120, %s121
      %p130 = scmp.eq.s32.totalorder %s26, 0
      %p131 = por %p129, %p130
      %p132 = scmp.ne.s32.totalorder %s120, %s121
      %p133 = scmp.eq.s32.totalorder %s27, 1
      %p134 = por %p132, %p133
      %p136 = scmp.ne.s32.totalorder %s121, %s135
      %p137 = scmp.eq.s32.totalorder %s27, 0
      %p138 = por %p136, %p137
      %s140 = sadd.s32 %s139, 1
      %p143 = scmp.eq.s32.totalorder %s21, 1
      %p144 = scmp.ne.s32.totalorder %s139, %s141
      %p145 = scmp.eq.s32.totalorder %s21, 0
      %p146 = por %p144, %p145
      %p147 = scmp.ne.s32.totalorder %s139, %s141
      %p148 = scmp.eq.s32.totalorder %s26, 1
      %p149 = por %p147, %p148
      %p150 = scmp.ne.s32.totalorder %s141, %s142
      %p151 = scmp.eq.s32.totalorder %s26, 0
      %p152 = por %p150, %p151
      %p153 = scmp.ne.s32.totalorder %s141, %s142
      %p154 = scmp.eq.s32.totalorder %s27, 1
      %p155 = por %p153, %p154
      %p157 = scmp.ne.s32.totalorder %s142, %s156
      %p158 = scmp.eq.s32.totalorder %s27, 0
      %p159 = por %p157, %p158
      %s161 = sadd.s32 %s160, 1
      %p164 = scmp.eq.s32.totalorder %s21, 1
      %p165 = scmp.ne.s32.totalorder %s160, %s162
      %p166 = scmp.eq.s32.totalorder %s21, 0
      %p167 = por %p165, %p166
      %p168 = scmp.ne.s32.totalorder %s160, %s162
      %p169 = scmp.eq.s32.totalorder %s26, 1
      %p170 = por %p168, %p169
      %p171 = scmp.ne.s32.totalorder %s162, %s163
      %p172 = scmp.eq.s32.totalorder %s26, 0
      %p173 = por %p171, %p172
      %p174 = scmp.ne.s32.totalorder %s162, %s163
      %p175 = scmp.eq.s32.totalorder %s27, 1
      %p176 = por %p174, %p175
      %p178 = scmp.ne.s32.totalorder %s163, %s177
      %p179 = scmp.eq.s32.totalorder %s27, 0
      %p180 = por %p178, %p179
      %s182 = sadd.s32 %s181, 1
      %p185 = scmp.eq.s32.totalorder %s21, 1
      %p186 = scmp.ne.s32.totalorder %s181, %s183
      %p187 = scmp.eq.s32.totalorder %s21, 0
      %p188 = por %p186, %p187
      %p189 = scmp.ne.s32.totalorder %s181, %s183
      %p190 = scmp.eq.s32.totalorder %s26, 1
      %p191 = por %p189, %p190
      %p192 = scmp.ne.s32.totalorder %s183, %s184
      %p193 = scmp.eq.s32.totalorder %s26, 0
      %p194 = por %p192, %p193
      %p195 = scmp.ne.s32.totalorder %s183, %s184
      %p196 = scmp.eq.s32.totalorder %s27, 1
      %p197 = por %p195, %p196
      %p199 = scmp.ne.s32.totalorder %s184, %s198
      %p200 = scmp.eq.s32.totalorder %s27, 0
      %p201 = por %p199, %p200
      %s203 = sadd.s32 %s202, 1
      %p206 = scmp.eq.s32.totalorder %s21, 1
      %p207 = scmp.ne.s32.totalorder %s202, %s204
      %p208 = scmp.eq.s32.totalorder %s21, 0
      %p209 = por %p207, %p208
      %p210 = scmp.ne.s32.totalorder %s202, %s204
      %p211 = scmp.eq.s32.totalorder %s26, 1
      %p212 = por %p210, %p211
      %p213 = scmp.ne.s32.totalorder %s204, %s205
      %p214 = scmp.eq.s32.totalorder %s26, 0
      %p215 = por %p213, %p214
      %p216 = scmp.ne.s32.totalorder %s204, %s205
      %p217 = scmp.eq.s32.totalorder %s27, 1
      %p218 = por %p216, %p217
      %p220 = scmp.ne.s32.totalorder %s205, %s219
      %p221 = scmp.eq.s32.totalorder %s27, 0
      %p222 = por %p220, %p221
      %s224 = sadd.s32 %s223, 1
      %p227 = scmp.eq.s32.totalorder %s21, 1
      %p228 = scmp.ne.s32.totalorder %s223, %s225
      %p229 = scmp.eq.s32.totalorder %s21, 0
      %p230 = por %p228, %p229
      %p231 = scmp.ne.s32.totalorder %s223, %s225
      %p232 = scmp.eq.s32.totalorder %s26, 1
      %p233 = por %p231, %p232
      %p234 = scmp.ne.s32.totalorder %s225, %s226
      %p235 = scmp.eq.s32.totalorder %s26, 0
      %p236 = por %p234, %p235
      %p237 = scmp.ne.s32.totalorder %s225, %s226
      %p238 = scmp.eq.s32.totalorder %s27, 1
      %p239 = por %p237, %p238
      %p241 = scmp.ne.s32.totalorder %s226, %s240
      %p242 = scmp.eq.s32.totalorder %s27, 0
      %p243 = por %p241, %p242
      %s245 = sadd.s32 %s244, 1
      %p248 = scmp.eq.s32.totalorder %s21, 1
      %p249 = scmp.ne.s32.totalorder %s244, %s246
      %p250 = scmp.eq.s32.totalorder %s21, 0
      %p251 = por %p249, %p250
      %p252 = scmp.ne.s32.totalorder %s244, %s246
      %p253 = scmp.eq.s32.totalorder %s26, 1
      %p254 = por %p252, %p253
      %p255 = scmp.ne.s32.totalorder %s246, %s247
      %p256 = scmp.eq.s32.totalorder %s26, 0
      %p257 = por %p255, %p256
      %p258 = scmp.ne.s32.totalorder %s246, %s247
      %p259 = scmp.eq.s32.totalorder %s27, 1
      %p260 = por %p258, %p259
      %p262 = scmp.ne.s32.totalorder %s247, %s261
      %p263 = scmp.eq.s32.totalorder %s27, 0
      %p264 = por %p262, %p263
      %s266 = sadd.s32 %s265, 1
      %p269 = scmp.eq.s32.totalorder %s21, 1
      %p270 = scmp.ne.s32.totalorder %s265, %s267
      %p271 = scmp.eq.s32.totalorder %s21, 0
      %p272 = por %p270, %p271
      %p273 = scmp.ne.s32.totalorder %s265, %s267
      %p274 = scmp.eq.s32.totalorder %s26, 1
      %p275 = por %p273, %p274
      %p276 = scmp.ne.s32.totalorder %s267, %s268
      %p277 = scmp.eq.s32.totalorder %s26, 0
      %p278 = por %p276, %p277
      %p279 = scmp.ne.s32.totalorder %s267, %s268
      %p280 = scmp.eq.s32.totalorder %s27, 1
      %p281 = por %p279, %p280
      %p283 = scmp.ne.s32.totalorder %s268, %s282
      %p284 = scmp.eq.s32.totalorder %s27, 0
      %p285 = por %p283, %p284
      %s286 = ssub.s32 %s21, %s28
      %p287 = scmp.eq.s32.totalorder %s286, 0
      %s289 = sadd.s32 %s288, 1
      %s290 = scalar_select %p287, %s288, %s289
      %p293 = pneg %p287
      %p294 = scmp.eq.s32.totalorder %s21, 1
      %p295 = por %p293, %p294
      %p296 = scmp.ne.s32.totalorder %s288, %s291
      %p297 = scmp.eq.s32.totalorder %s21, 0
      %p298 = por %p296, %p297
      %p299 = scmp.ne.s32.totalorder %s288, %s291
      %p300 = scmp.eq.s32.totalorder %s26, 1
      %p301 = por %p299, %p300
      %p302 = scmp.ne.s32.totalorder %s291, %s292
      %p303 = scmp.eq.s32.totalorder %s26, 0
      %p304 = por %p302, %p303
      %p305 = scmp.ne.s32.totalorder %s291, %s292
      %p306 = scmp.eq.s32.totalorder %s27, 1
      %p307 = por %p305, %p306
      %p309 = scmp.ne.s32.totalorder %s292, %s308
      %p310 = scmp.eq.s32.totalorder %s27, 0
      %p311 = por %p309, %p310
      %p312 = scmp.le.s32.totalorder 1, %s21
      %p313 = scmp.lt.s32.totalorder %s21, 3
      %p314 = pnand %p312, %p313
      %p315 = pneg %p314
      // Predicated region
      $region9: #{tpu_custom_call.1} parent=5 // pred_check
        _
      $region10: #{tpu_custom_call.1} parent=5 // pred_check_branch
        %317 = sbr.rel (%p314) target = $region12
      $region11: #{tpu_custom_call.1} parent=5 // pred_region
        %s318 = ssub.s32 %s21, 1
        // Predicated region
        $region13: #{tpu_custom_call.1} parent=11 // pred_check
          %p319 = pneg %p68
        $region14: #{tpu_custom_call.1} parent=11 // pred_check_branch
          %321 = sbr.rel (%p319) target = $region16
        $region15: #{tpu_custom_call.1} parent=11 // pred_region
          _
        $region16: #{tpu_custom_call.1} parent=11 // pred_fallthru
          _
        // Predicated region
        $region17: #{tpu_custom_call.1} parent=11 // pred_check
          %p322 = pneg %p89
        $region18: #{tpu_custom_call.1} parent=11 // pred_check_branch
          %324 = sbr.rel (%p322) target = $region20
        $region19: #{tpu_custom_call.1} parent=11 // pred_region
          _
        $region20: #{tpu_custom_call.1} parent=11 // pred_fallthru
          _
        // Predicated region
        $region21: #{tpu_custom_call.1} parent=11 // pred_check
          %p325 = pneg %p110
        $region22: #{tpu_custom_call.1} parent=11 // pred_check_branch
          %327 = sbr.rel (%p325) target = $region24
        $region23: #{tpu_custom_call.1} parent=11 // pred_region
          _
        $region24: #{tpu_custom_call.1} parent=11 // pred_fallthru
          _
        // Predicated region
        $region25: #{tpu_custom_call.1} parent=11 // pred_check
          %p328 = pneg %p131
        $region26: #{tpu_custom_call.1} parent=11 // pred_check_branch
          %330 = sbr.rel (%p328) target = $region28
        $region27: #{tpu_custom_call.1} parent=11 // pred_region
          _
        $region28: #{tpu_custom_call.1} parent=11 // pred_fallthru
          _
        // Predicated region
        $region29: #{tpu_custom_call.1} parent=11 // pred_check
          %p331 = pneg %p152
        $region30: #{tpu_custom_call.1} parent=11 // pred_check_branch
          %333 = sbr.rel (%p331) target = $region32
        $region31: #{tpu_custom_call.1} parent=11 // pred_region
          _
        $region32: #{tpu_custom_call.1} parent=11 // pred_fallthru
          _
        // Predicated region
        $region33: #{tpu_custom_call.1} parent=11 // pred_check
          %p334 = pneg %p173
        $region34: #{tpu_custom_call.1} parent=11 // pred_check_branch
          %336 = sbr.rel (%p334) target = $region36
        $region35: #{tpu_custom_call.1} parent=11 // pred_region
          _
        $region36: #{tpu_custom_call.1} parent=11 // pred_fallthru
          _
        // Predicated region
        $region37: #{tpu_custom_call.1} parent=11 // pred_check
          %p337 = pneg %p194
        $region38: #{tpu_custom_call.1} parent=11 // pred_check_branch
          %339 = sbr.rel (%p337) target = $region40
        $region39: #{tpu_custom_call.1} parent=11 // pred_region
          _
        $region40: #{tpu_custom_call.1} parent=11 // pred_fallthru
          _
        // Predicated region
        $region41: #{tpu_custom_call.1} parent=11 // pred_check
          %p340 = pneg %p215
        $region42: #{tpu_custom_call.1} parent=11 // pred_check_branch
          %342 = sbr.rel (%p340) target = $region44
        $region43: #{tpu_custom_call.1} parent=11 // pred_region
          _
        $region44: #{tpu_custom_call.1} parent=11 // pred_fallthru
          _
        // Predicated region
        $region45: #{tpu_custom_call.1} parent=11 // pred_check
          %p343 = pneg %p236
        $region46: #{tpu_custom_call.1} parent=11 // pred_check_branch
          %345 = sbr.rel (%p343) target = $region48
        $region47: #{tpu_custom_call.1} parent=11 // pred_region
          _
        $region48: #{tpu_custom_call.1} parent=11 // pred_fallthru
          _
        // Predicated region
        $region49: #{tpu_custom_call.1} parent=11 // pred_check
          %p346 = pneg %p257
        $region50: #{tpu_custom_call.1} parent=11 // pred_check_branch
          %348 = sbr.rel (%p346) target = $region52
        $region51: #{tpu_custom_call.1} parent=11 // pred_region
          _
        $region52: #{tpu_custom_call.1} parent=11 // pred_fallthru
          _
        // Predicated region
        $region53: #{tpu_custom_call.1} parent=11 // pred_check
          %p349 = pneg %p278
        $region54: #{tpu_custom_call.1} parent=11 // pred_check_branch
          %351 = sbr.rel (%p349) target = $region56
        $region55: #{tpu_custom_call.1} parent=11 // pred_region
          _
        $region56: #{tpu_custom_call.1} parent=11 // pred_fallthru
          _
      $region12: #{tpu_custom_call.1} parent=5 // pred_fallthru
        _
      %p352 = scmp.lt.s32.totalorder %s21, 2
      // Predicated region
      $region57: #{tpu_custom_call.1} parent=5 // pred_check
        %p353 = pneg %p352
      $region58: #{tpu_custom_call.1} parent=5 // pred_check_branch
        %355 = sbr.rel (%p353) target = $region60
      $region59: #{tpu_custom_call.1} parent=5 // pred_region
        // Predicated region
        $region61: #{tpu_custom_call.1} parent=59 // pred_check
          %p356 = pneg %p41
        $region62: #{tpu_custom_call.1} parent=59 // pred_check_branch
          %358 = sbr.rel (%p356) target = $region64
        $region63: #{tpu_custom_call.1} parent=59 // pred_region
          %p359 = scmp.lt.s32.totalorder %s21, 1
          %s360 = scalar_select %p359, %s21, 1
          %s361 = smul.addr %s360, 8
          %s362 = scalar_lea.vmem %s0, %s361
        $region64: #{tpu_custom_call.1} parent=59 // pred_fallthru
          _
      $region60: #{tpu_custom_call.1} parent=5 // pred_fallthru
        _
      %p363 = scmp.le.s32.totalorder 1, %s21
      %p364 = scmp.lt.s32.totalorder %s21, 3
      %p365 = pnand %p363, %p364
      %p366 = pneg %p365
      // Predicated region
      $region65: #{tpu_custom_call.1} parent=5 // pred_check
        _
      $region66: #{tpu_custom_call.1} parent=5 // pred_check_branch
        %368 = sbr.rel (%p365) target = $region68
      $region67: #{tpu_custom_call.1} parent=5 // pred_region
        %s369 = ssub.s32 %s21, 1
        %p370 = scmp.lt.s32.totalorder %s26, 1
        %s371 = scalar_select %p370, %s26, 1
        %s372 = smul.addr %s371, 8
        %s373 = scalar_lea.vmem %s0, %s372
        %p374 = pneg %p47
        %p375 = pneg %p44
        %p376 = pneg %p68
        %p377 = pneg %p65
        %p378 = pneg %p89
        %p379 = pneg %p86
        %p380 = pneg %p110
        %p381 = pneg %p107
        %p382 = pneg %p131
        %p383 = pneg %p128
        %p384 = pneg %p152
        %p385 = pneg %p149
        %p386 = pneg %p173
        %p387 = pneg %p170
        %p388 = pneg %p194
        %p389 = pneg %p191
        %p390 = pneg %p215
        %p391 = pneg %p212
        %p392 = pneg %p236
        %p393 = pneg %p233
        %p394 = pneg %p257
        %p395 = pneg %p254
        %p396 = pneg %p278
        %p397 = pneg %p275
        %p398 = pneg %p304
        %p399 = pneg %p301
        %s400 = sand.u32 %s291, 1
        %s401 = scalar_lea.sflag [#allocation3], %s400
        %s402 = sand.u32 %s291, 1
        %s403 = smul.addr %s402, 8
        %s404 = scalar_lea.vmem [#allocation2], %s403
        %p405 = scmp.lt.s32.totalorder %s26, 1
        %s406 = scalar_select %p405, %s26, 1
        %s407 = smul.addr %s406, 8
        %s408 = scalar_lea.vmem %s0, %s407
        %v410 = vld [vmem:[%s408] sm:$0xff]
        %v411 = vld [vmem:[%s1] sm:$0x1]
        %v412 = vld [vmem:[%s2] sm:$0x1]
        %vm413 = vcmask 261120
        %v414 = vsel %vm413, %v410, 0.0
        %415 = vadd.xlane.f32.xlu0 %v414
        %v416 = vpop.xlane.xlu0 %415
        %v417 = vrcp.pop 32.0
        %v418 = vmul.f32 32.0, %v417
        %v419 = vsub.f32 1.0, %v418
        %v420 = vmul.f32 %v417, %v419
        %v421 = vadd.f32 %v417, %v420
        %vm422 = vweird.f32 %v417
        %v423 = vsel %vm422, %v417, %v421
        %v424 = vmul.f32 %v416, %v423
        %v425 = vsub.f32 %v410, %v424
        %v426 = vmul.f32 %v425, %v425
        %v427 = vsel %vm413, %v426, 0.0
        %428 = vadd.xlane.f32.xlu0 %v427
        %v429 = vpop.xlane.xlu0 %428
        %v430 = vmul.f32 %v429, %v423
        %v431 = vadd.f32 %v430, 1e-05
        %v432 = vrsqrt.pop %v431
        %v433 = vmul.f32 %v432, %v431
        %v434 = vmul.f32 %v433, %v432
        %v435 = vmul.f32 0.5, %v434
        %v436 = vsub.f32 1.5, %v435
        %v437 = vmul.f32 %v432, %v436
        %vm438 = vweird.f32 %v431
        %vm439 = vweird.f32 %v432
        %vm440 = vmor %vm438, %vm439
        %v441 = vsel %vm440, %v432, %v437
        %v442 = vmul.f32 %v425, %v441
        %v444 = vperm.slane %v411, 0
        %v446 = vmul.f32 %v442, %v444
        %v448 = vperm.slane %v412, 0
        %v450 = vadd.f32 %v446, %v448
        %v451 = vpack.c.bf16 %v450, %v450
        %v452 = vld [vmem:[%s3] sm:$0xf]
        %v453 = vld [vmem:[%s3 + $0x4] sm:$0xf]
        %v454 = vld [vmem:[%s3 + $0x8] sm:$0xf]
        %v455 = vld [vmem:[%s3 + $0xc] sm:$0xf]
        %v460 = vunpack.c.l.b16 %v452
        %v461 = vunpack.c.l.b16 %v453
        %v462 = vunpack.c.l.b16 %v454
        %v463 = vunpack.c.l.b16 %v455
        %v464 = vpack.c.b16 %v461, %v460
        %v465 = vpack.c.b16 %v463, %v462
        %v469 = vsel %vm413, %v451, 0
        %471 = vmatpush.bf16.msra.mxu0 0
        %472 = vmatpush.bf16.msra.mxu0 0
        %473 = vmatpush.bf16.msra.mxu0 0
        %474 = vmatpush.bf16.msra.mxu0 0
        %475 = vmatpush.bf16.msra.mxu0 0
        %476 = vmatpush.bf16.msra.mxu0 0
        %477 = vmatpush.bf16.msra.mxu0 %v465
        %478 = vmatpush.bf16.msra.mxu0 %v464
        %479 = vmatmul.bf16.gmra.mxu0 %v469
        %v480 = vpop.f32.mrf.mxu0
        %v481 = vadd.f32 0.0, %v480
        %v482 = vpop.f32.mrf.mxu0
        %483 = vdwg.mxu0
        %v484 = vpack.c.bf16 %v481, %v481
        %486 = vrot.lane.b32.xlu0 %v484, 120
        %v487 = vpop.permute.xlu0 %486
        %488 = vrot.lane.b32.xlu0 %v484, 112
        %v489 = vpop.permute.xlu0 %488
        %490 = vrot.lane.b32.xlu0 %v484, 104
        %v491 = vpop.permute.xlu0 %490
        %v494 = vpack.i.b16 %v487, %v484
        %v495 = vshrl.u32 %v484, 16
        %v496 = vshrl.u32 %v487, 16
        %v497 = vpack.i.b16 %v496, %v495
        %v500 = vpack.i.b16 %v491, %v489
        %v501 = vshrl.u32 %v489, 16
        %v502 = vshrl.u32 %v491, 16
        %v503 = vpack.i.b16 %v502, %v501
        %v506 = vunpack.c.l.s4 1983009808
        %v507 = vunpack.c.0.s8 %v506
        %v508 = vperm.slane %v494, %v507
        %v511 = vunpack.c.l.s4 1983009808
        %v512 = vunpack.c.0.s8 %v511
        %v513 = vperm.slane %v500, %v512
        %v514 = vrot.slane %v513, 4
        %vm515 = vcmask 1047556
        %v516 = vsel %vm515, %v514, %v508
        %v517 = vrot.slane %v508, 4
        %v518 = vsel %vm515, %v513, %v517
        %v520 = vunpack.c.l.s4 1934713408
        %v521 = vunpack.c.0.s8 %v520
        %v522 = vperm.slane %v516, %v521
        %v524 = vunpack.c.l.s4 1934713408
        %v525 = vunpack.c.0.s8 %v524
        %v526 = vperm.slane %v518, %v525
        %v527 = vrot.slane %v522, 4
        %v528 = vsel %vm515, 0, %v527
        %v529 = vrot.slane %v526, 4
        %v530 = vsel %vm515, 0, %v529
        %v533 = vunpack.c.l.s4 1983009808
        %v534 = vunpack.c.0.s8 %v533
        %v535 = vperm.slane %v497, %v534
        %v538 = vunpack.c.l.s4 1983009808
        %v539 = vunpack.c.0.s8 %v538
        %v540 = vperm.slane %v503, %v539
        %v541 = vrot.slane %v540, 4
        %v542 = vsel %vm515, %v541, %v535
        %v543 = vrot.slane %v535, 4
        %v544 = vsel %vm515, %v540, %v543
        %v546 = vunpack.c.l.s4 1934713408
        %v547 = vunpack.c.0.s8 %v546
        %v548 = vperm.slane %v542, %v547
        %v550 = vunpack.c.l.s4 1934713408
        %v551 = vunpack.c.0.s8 %v550
        %v552 = vperm.slane %v544, %v551
        %v553 = vrot.slane %v548, 4
        %v554 = vsel %vm515, 0, %v553
        %v555 = vrot.slane %v552, 4
        %v556 = vsel %vm515, 0, %v555
        %v557 = vsel %vm515, %v529, %v522
        %v559 = vunpack.c.l.s4 1983009808
        %v560 = vunpack.c.0.s8 %v559
        %v561 = vperm.slane %v557, %v560
        %v562 = vrot.slane %v530, 4
        %v563 = vsel %vm515, %v562, %v528
        %v565 = vunpack.c.l.s4 1983009808
        %v566 = vunpack.c.0.s8 %v565
        %v567 = vperm.slane %v563, %v566
        %v568 = vrot.slane %v567, 4
        %v569 = vsel %vm515, %v568, %v561
        %v571 = vunpack.c.l.s4 1934713408
        %v572 = vunpack.c.0.s8 %v571
        %v573 = vperm.slane %v569, %v572
        %v574 = vrot.slane %v573, 4
        %v575 = vsel %vm515, 0, %v574
        %v576 = vsel %vm515, %v555, %v548
        %v578 = vunpack.c.l.s4 1983009808
        %v579 = vunpack.c.0.s8 %v578
        %v580 = vperm.slane %v576, %v579
        %v581 = vrot.slane %v556, 4
        %v582 = vsel %vm515, %v581, %v554
        %v584 = vunpack.c.l.s4 1983009808
        %v585 = vunpack.c.0.s8 %v584
        %v586 = vperm.slane %v582, %v585
        %v587 = vrot.slane %v586, 4
        %v588 = vsel %vm515, %v587, %v580
        %v590 = vunpack.c.l.s4 1934713408
        %v591 = vunpack.c.0.s8 %v590
        %v592 = vperm.slane %v588, %v591
        %v593 = vrot.slane %v592, 4
        %v594 = vsel %vm515, 0, %v593
        %v597 = vpack.i.b16 %v592, %v573
        %v598 = vshrl.u32 %v573, 16
        %v599 = vshrl.u32 %v592, 16
        %v600 = vpack.i.b16 %v599, %v598
        %v603 = vpack.i.b16 %v594, %v575
        %v604 = vshrl.u32 %v575, 16
        %v605 = vshrl.u32 %v594, 16
        %v606 = vpack.i.b16 %v605, %v604
        %607 = vrot.lane.b32.xlu0 %v484, 96
        %v608 = vpop.permute.xlu0 %607
        %609 = vrot.lane.b32.xlu0 %v487, 96
        %v610 = vpop.permute.xlu0 %609
        %611 = vrot.lane.b32.xlu0 %v489, 96
        %v612 = vpop.permute.xlu0 %611
        %613 = vrot.lane.b32.xlu0 %v491, 96
        %v614 = vpop.permute.xlu0 %613
        %v617 = vpack.i.b16 %v610, %v608
        %v618 = vshrl.u32 %v608, 16
        %v619 = vshrl.u32 %v610, 16
        %v620 = vpack.i.b16 %v619, %v618
        %v623 = vpack.i.b16 %v614, %v612
        %v624 = vshrl.u32 %v612, 16
        %v625 = vshrl.u32 %v614, 16
        %v626 = vpack.i.b16 %v625, %v624
        %v629 = vunpack.c.l.s4 1983009808
        %v630 = vunpack.c.0.s8 %v629
        %v631 = vperm.slane %v617, %v630
        %v634 = vunpack.c.l.s4 1983009808
        %v635 = vunpack.c.0.s8 %v634
        %v636 = vperm.slane %v623, %v635
        %v637 = vrot.slane %v636, 4
        %v638 = vsel %vm515, %v637, %v631
        %v639 = vrot.slane %v631, 4
        %v640 = vsel %vm515, %v636, %v639
        %v642 = vunpack.c.l.s4 1934713408
        %v643 = vunpack.c.0.s8 %v642
        %v644 = vperm.slane %v638, %v643
        %v646 = vunpack.c.l.s4 1934713408
        %v647 = vunpack.c.0.s8 %v646
        %v648 = vperm.slane %v640, %v647
        %v649 = vrot.slane %v644, 4
        %v650 = vsel %vm515, 0, %v649
        %v651 = vrot.slane %v648, 4
        %v652 = vsel %vm515, 0, %v651
        %v655 = vunpack.c.l.s4 1983009808
        %v656 = vunpack.c.0.s8 %v655
        %v657 = vperm.slane %v620, %v656
        %v660 = vunpack.c.l.s4 1983009808
        %v661 = vunpack.c.0.s8 %v660
        %v662 = vperm.slane %v626, %v661
        %v663 = vrot.slane %v662, 4
        %v664 = vsel %vm515, %v663, %v657
        %v665 = vrot.slane %v657, 4
        %v666 = vsel %vm515, %v662, %v665
        %v668 = vunpack.c.l.s4 1934713408
        %v669 = vunpack.c.0.s8 %v668
        %v670 = vperm.slane %v664, %v669
        %v672 = vunpack.c.l.s4 1934713408
        %v673 = vunpack.c.0.s8 %v672
        %v674 = vperm.slane %v666, %v673
        %v675 = vrot.slane %v670, 4
        %v676 = vsel %vm515, 0, %v675
        %v677 = vrot.slane %v674, 4
        %v678 = vsel %vm515, 0, %v677
        %v679 = vsel %vm515, %v651, %v644
        %v681 = vunpack.c.l.s4 1983009808
        %v682 = vunpack.c.0.s8 %v681
        %v683 = vperm.slane %v679, %v682
        %v684 = vrot.slane %v652, 4
        %v685 = vsel %vm515, %v684, %v650
        %v687 = vunpack.c.l.s4 1983009808
        %v688 = vunpack.c.0.s8 %v687
        %v689 = vperm.slane %v685, %v688
        %v690 = vrot.slane %v689, 4
        %v691 = vsel %vm515, %v690, %v683
        %v693 = vunpack.c.l.s4 1934713408
        %v694 = vunpack.c.0.s8 %v693
        %v695 = vperm.slane %v691, %v694
        %v696 = vrot.slane %v695, 4
        %v697 = vsel %vm515, 0, %v696
        %v698 = vsel %vm515, %v677, %v670
        %v700 = vunpack.c.l.s4 1983009808
        %v701 = vunpack.c.0.s8 %v700
        %v702 = vperm.slane %v698, %v701
        %v703 = vrot.slane %v678, 4
        %v704 = vsel %vm515, %v703, %v676
        %v706 = vunpack.c.l.s4 1983009808
        %v707 = vunpack.c.0.s8 %v706
        %v708 = vperm.slane %v704, %v707
        %v709 = vrot.slane %v708, 4
        %v710 = vsel %vm515, %v709, %v702
        %v712 = vunpack.c.l.s4 1934713408
        %v713 = vunpack.c.0.s8 %v712
        %v714 = vperm.slane %v710, %v713
        %v715 = vrot.slane %v714, 4
        %v716 = vsel %vm515, 0, %v715
        %v719 = vpack.i.b16 %v714, %v695
        %v720 = vshrl.u32 %v695, 16
        %v721 = vshrl.u32 %v714, 16
        %v722 = vpack.i.b16 %v721, %v720
        %v725 = vpack.i.b16 %v716, %v697
        %v726 = vshrl.u32 %v697, 16
        %v727 = vshrl.u32 %v716, 16
        %v728 = vpack.i.b16 %v727, %v726
        %729 = vrot.lane.b32.xlu0 %v484, 64
        %v730 = vpop.permute.xlu0 %729
        %731 = vrot.lane.b32.xlu0 %v487, 64
        %v732 = vpop.permute.xlu0 %731
        %733 = vrot.lane.b32.xlu0 %v489, 64
        %v734 = vpop.permute.xlu0 %733
        %735 = vrot.lane.b32.xlu0 %v491, 64
        %v736 = vpop.permute.xlu0 %735
        %v739 = vpack.i.b16 %v732, %v730
        %v740 = vshrl.u32 %v730, 16
        %v741 = vshrl.u32 %v732, 16
        %v742 = vpack.i.b16 %v741, %v740
        %v745 = vpack.i.b16 %v736, %v734
        %v746 = vshrl.u32 %v734, 16
        %v747 = vshrl.u32 %v736, 16
        %v748 = vpack.i.b16 %v747, %v746
        %v751 = vunpack.c.l.s4 1983009808
        %v752 = vunpack.c.0.s8 %v751
        %v753 = vperm.slane %v739, %v752
        %v756 = vunpack.c.l.s4 1983009808
        %v757 = vunpack.c.0.s8 %v756
        %v758 = vperm.slane %v745, %v757
        %v759 = vrot.slane %v758, 4
        %v760 = vsel %vm515, %v759, %v753
        %v761 = vrot.slane %v753, 4
        %v762 = vsel %vm515, %v758, %v761
        %v764 = vunpack.c.l.s4 1934713408
        %v765 = vunpack.c.0.s8 %v764
        %v766 = vperm.slane %v760, %v765
        %v768 = vunpack.c.l.s4 1934713408
        %v769 = vunpack.c.0.s8 %v768
        %v770 = vperm.slane %v762, %v769
        %v771 = vrot.slane %v766, 4
        %v772 = vsel %vm515, 0, %v771
        %v773 = vrot.slane %v770, 4
        %v774 = vsel %vm515, 0, %v773
        %v777 = vunpack.c.l.s4 1983009808
        %v778 = vunpack.c.0.s8 %v777
        %v779 = vperm.slane %v742, %v778
        %v782 = vunpack.c.l.s4 1983009808
        %v783 = vunpack.c.0.s8 %v782
        %v784 = vperm.slane %v748, %v783
        %v785 = vrot.slane %v784, 4
        %v786 = vsel %vm515, %v785, %v779
        %v787 = vrot.slane %v779, 4
        %v788 = vsel %vm515, %v784, %v787
        %v790 = vunpack.c.l.s4 1934713408
        %v791 = vunpack.c.0.s8 %v790
        %v792 = vperm.slane %v786, %v791
        %v794 = vunpack.c.l.s4 1934713408
        %v795 = vunpack.c.0.s8 %v794
        %v796 = vperm.slane %v788, %v795
        %v797 = vrot.slane %v792, 4
        %v798 = vsel %vm515, 0, %v797
        %v799 = vrot.slane %v796, 4
        %v800 = vsel %vm515, 0, %v799
        %v801 = vsel %vm515, %v773, %v766
        %v803 = vunpack.c.l.s4 1983009808
        %v804 = vunpack.c.0.s8 %v803
        %v805 = vperm.slane %v801, %v804
        %v806 = vrot.slane %v774, 4
        %v807 = vsel %vm515, %v806, %v772
        %v809 = vunpack.c.l.s4 1983009808
        %v810 = vunpack.c.0.s8 %v809
        %v811 = vperm.slane %v807, %v810
        %v812 = vrot.slane %v811, 4
        %v813 = vsel %vm515, %v812, %v805
        %v815 = vunpack.c.l.s4 1934713408
        %v816 = vunpack.c.0.s8 %v815
        %v817 = vperm.slane %v813, %v816
        %v818 = vrot.slane %v817, 4
        %v819 = vsel %vm515, 0, %v818
        %v820 = vsel %vm515, %v799, %v792
        %v822 = vunpack.c.l.s4 1983009808
        %v823 = vunpack.c.0.s8 %v822
        %v824 = vperm.slane %v820, %v823
        %v825 = vrot.slane %v800, 4
        %v826 = vsel %vm515, %v825, %v798
        %v828 = vunpack.c.l.s4 1983009808
        %v829 = vunpack.c.0.s8 %v828
        %v830 = vperm.slane %v826, %v829
        %v831 = vrot.slane %v830, 4
        %v832 = vsel %vm515, %v831, %v824
        %v834 = vunpack.c.l.s4 1934713408
        %v835 = vunpack.c.0.s8 %v834
        %v836 = vperm.slane %v832, %v835
        %v837 = vrot.slane %v836, 4
        %v838 = vsel %vm515, 0, %v837
        %v841 = vpack.i.b16 %v836, %v817
        %v842 = vshrl.u32 %v817, 16
        %v843 = vshrl.u32 %v836, 16
        %v844 = vpack.i.b16 %v843, %v842
        %v847 = vpack.i.b16 %v838, %v819
        %v848 = vshrl.u32 %v819, 16
        %v849 = vshrl.u32 %v838, 16
        %v850 = vpack.i.b16 %v849, %v848
        %vm851 = vcmask 64512
        %v853 = vsel %vm851, %v597, 0
        %v856 = vsel %vm851, %v719, 0
        %858 = vmatpush.bf16.xpose.msra.mxu0 0
        %859 = vmatpush.bf16.xpose.msra.mxu0 0
        %860 = vmatpush.bf16.xpose.msra.mxu0 0
        %861 = vmatpush.bf16.xpose.msra.mxu0 0
        %862 = vmatpush.bf16.xpose.msra.mxu0 0
        %863 = vmatpush.bf16.xpose.msra.mxu0 0
        %864 = vmatpush.bf16.xpose.msra.mxu0 0
        %865 = vmatpush.bf16.xpose.msra.mxu0 %v856
        %866 = vmatmul.bf16.gmra.mxu0 %v853
        %v867 = vpop.f32.mrf.mxu0
        %v868 = vadd.f32 0.0, %v867
        %v869 = vpop.f32.mrf.mxu0
        %870 = vdwg.mxu0
        %v872 = vsel %vm851, %v600, 0
        %v875 = vsel %vm851, %v722, 0
        %877 = vmatpush.bf16.xpose.msra.mxu0 0
        %878 = vmatpush.bf16.xpose.msra.mxu0 0
        %879 = vmatpush.bf16.xpose.msra.mxu0 0
        %880 = vmatpush.bf16.xpose.msra.mxu0 0
        %881 = vmatpush.bf16.xpose.msra.mxu0 0
        %882 = vmatpush.bf16.xpose.msra.mxu0 0
        %883 = vmatpush.bf16.xpose.msra.mxu0 0
        %884 = vmatpush.bf16.xpose.msra.mxu0 %v875
        %885 = vmatmul.bf16.gmra.mxu0 %v872
        %v886 = vpop.f32.mrf.mxu0
        %v887 = vadd.f32 0.0, %v886
        %v888 = vpop.f32.mrf.mxu0
        %889 = vdwg.mxu0
        %v891 = vsel %vm851, %v603, 0
        %v894 = vsel %vm851, %v725, 0
        %896 = vmatpush.bf16.xpose.msra.mxu0 0
        %897 = vmatpush.bf16.xpose.msra.mxu0 0
        %898 = vmatpush.bf16.xpose.msra.mxu0 0
        %899 = vmatpush.bf16.xpose.msra.mxu0 0
        %900 = vmatpush.bf16.xpose.msra.mxu0 0
        %901 = vmatpush.bf16.xpose.msra.mxu0 0
        %902 = vmatpush.bf16.xpose.msra.mxu0 0
        %903 = vmatpush.bf16.xpose.msra.mxu0 %v894
        %904 = vmatmul.bf16.gmra.mxu0 %v891
        %v905 = vpop.f32.mrf.mxu0
        %v906 = vadd.f32 0.0, %v905
        %v907 = vpop.f32.mrf.mxu0
        %908 = vdwg.mxu0
        %v910 = vsel %vm851, %v606, 0
        %v913 = vsel %vm851, %v728, 0
        %915 = vmatpush.bf16.xpose.msra.mxu0 0
        %916 = vmatpush.bf16.xpose.msra.mxu0 0
        %917 = vmatpush.bf16.xpose.msra.mxu0 0
        %918 = vmatpush.bf16.xpose.msra.mxu0 0
        %919 = vmatpush.bf16.xpose.msra.mxu0 0
        %920 = vmatpush.bf16.xpose.msra.mxu0 0
        %921 = vmatpush.bf16.xpose.msra.mxu0 0
        %922 = vmatpush.bf16.xpose.msra.mxu0 %v913
        %923 = vmatmul.bf16.gmra.mxu0 %v910
        %v924 = vpop.f32.mrf.mxu0
        %v925 = vadd.f32 0.0, %v924
        %v926 = vpop.f32.mrf.mxu0
        %927 = vdwg.mxu0
        %v928 = vlaneseq
        %v929 = vshrl.u32 %v928, 7
        %v930 = vlaneseq
        %v931 = vand.u32 %v930, 127
        %vm932 = vcmp.ge.s32.totalorder %v929, %v931
        %v933 = vsel %vm932, 1, 0
        %vm934 = vcmp.eq.s32.totalorder %v933, 1
        %v935 = vsel %vm934, %v868, -inf
        %v936 = vsel %vm934, %v887, -inf
        %v937 = vsel %vm934, %v906, -inf
        %v938 = vsel %vm934, %v925, -inf
        %v939 = vsel %vm851, %v935, -inf
        %940 = vmax.xlane.f32.xlu0 %v939
        %v941 = vpop.xlane.xlu0 %940
        %v942 = vsel %vm851, %v936, -inf
        %943 = vmax.xlane.f32.xlu0 %v942
        %v944 = vpop.xlane.xlu0 %943
        %v945 = vsel %vm851, %v937, -inf
        %946 = vmax.xlane.f32.xlu0 %v945
        %v947 = vpop.xlane.xlu0 %946
        %v948 = vsel %vm851, %v938, -inf
        %949 = vmax.xlane.f32.xlu0 %v948
        %v950 = vpop.xlane.xlu0 %949
        %v951 = vsub.f32 %v935, %v941
        %v952 = vsub.f32 %v936, %v944
        %v953 = vsub.f32 %v937, %v947
        %v954 = vsub.f32 %v938, %v950
        %v955 = vmul.f32 %v951, 1.442695
        %v956 = vpow.pop %v955
        %v957 = vmul.f32 %v952, 1.442695
        %v958 = vpow.pop %v957
        %v959 = vmul.f32 %v953, 1.442695
        %v960 = vpow.pop %v959
        %v961 = vmul.f32 %v954, 1.442695
        %v962 = vpow.pop %v961
        %v963 = vsel %vm851, %v956, 0.0
        %964 = vadd.xlane.f32.xlu0 %v963
        %v965 = vpop.xlane.xlu0 %964
        %v966 = vsel %vm851, %v958, 0.0
        %967 = vadd.xlane.f32.xlu0 %v966
        %v968 = vpop.xlane.xlu0 %967
        %v969 = vsel %vm851, %v960, 0.0
        %970 = vadd.xlane.f32.xlu0 %v969
        %v971 = vpop.xlane.xlu0 %970
        %v972 = vsel %vm851, %v962, 0.0
        %973 = vadd.xlane.f32.xlu0 %v972
        %v974 = vpop.xlane.xlu0 %973
        %v975 = vrcp.pop %v965
        %v976 = vrcp.pop %v968
        %v977 = vrcp.pop %v971
        %v978 = vrcp.pop %v974
        %v979 = vmul.f32 %v956, %v975
        %v980 = vmul.f32 %v958, %v976
        %v981 = vmul.f32 %v960, %v977
        %v982 = vmul.f32 %v962, %v978
        %v983 = vpack.c.bf16 %v979, %v979
        %v984 = vpack.c.bf16 %v980, %v980
        %v985 = vpack.c.bf16 %v981, %v981
        %v986 = vpack.c.bf16 %v982, %v982
        %v988 = vsel %vm851, %v983, 0
        %vm990 = vcmask 1043456
        %v992 = vsel %vm990, %v841, 0
        %994 = vmatpush.bf16.msra.mxu0 0
        %995 = vmatpush.bf16.msra.mxu0 0
        %996 = vmatpush.bf16.msra.mxu0 0
        %997 = vmatpush.bf16.msra.mxu0 0
        %998 = vmatpush.bf16.msra.mxu0 0
        %999 = vmatpush.bf16.msra.mxu0 0
        %1000 = vmatpush.bf16.msra.mxu0 0
        %1001 = vmatpush.bf16.msra.mxu0 %v992
        %1002 = vmatmul.bf16.gmra.mxu0 %v988
        %v1003 = vpop.f32.mrf.mxu0
        %v1004 = vadd.f32 0.0, %v1003
        %v1005 = vpop.f32.mrf.mxu0
        %1006 = vdwg.mxu0
        %v1008 = vsel %vm851, %v984, 0
        %v1011 = vsel %vm990, %v844, 0
        %1013 = vmatpush.bf16.msra.mxu0 0
        %1014 = vmatpush.bf16.msra.mxu0 0
        %1015 = vmatpush.bf16.msra.mxu0 0
        %1016 = vmatpush.bf16.msra.mxu0 0
        %1017 = vmatpush.bf16.msra.mxu0 0
        %1018 = vmatpush.bf16.msra.mxu0 0
        %1019 = vmatpush.bf16.msra.mxu0 0
        %1020 = vmatpush.bf16.msra.mxu0 %v1011
        %1021 = vmatmul.bf16.gmra.mxu0 %v1008
        %v1022 = vpop.f32.mrf.mxu0
        %v1023 = vadd.f32 0.0, %v1022
        %v1024 = vpop.f32.mrf.mxu0
        %1025 = vdwg.mxu0
        %v1027 = vsel %vm851, %v985, 0
        %v1030 = vsel %vm990, %v847, 0
        %1032 = vmatpush.bf16.msra.mxu0 0
        %1033 = vmatpush.bf16.msra.mxu0 0
        %1034 = vmatpush.bf16.msra.mxu0 0
        %1035 = vmatpush.bf16.msra.mxu0 0
        %1036 = vmatpush.bf16.msra.mxu0 0
        %1037 = vmatpush.bf16.msra.mxu0 0
        %1038 = vmatpush.bf16.msra.mxu0 0
        %1039 = vmatpush.bf16.msra.mxu0 %v1030
        %1040 = vmatmul.bf16.gmra.mxu0 %v1027
        %v1041 = vpop.f32.mrf.mxu0
        %v1042 = vadd.f32 0.0, %v1041
        %v1043 = vpop.f32.mrf.mxu0
        %1044 = vdwg.mxu0
        %v1046 = vsel %vm851, %v986, 0
        %v1049 = vsel %vm990, %v850, 0
        %1051 = vmatpush.bf16.msra.mxu0 0
        %1052 = vmatpush.bf16.msra.mxu0 0
        %1053 = vmatpush.bf16.msra.mxu0 0
        %1054 = vmatpush.bf16.msra.mxu0 0
        %1055 = vmatpush.bf16.msra.mxu0 0
        %1056 = vmatpush.bf16.msra.mxu0 0
        %1057 = vmatpush.bf16.msra.mxu0 0
        %1058 = vmatpush.bf16.msra.mxu0 %v1049
        %1059 = vmatmul.bf16.gmra.mxu0 %v1046
        %v1060 = vpop.f32.mrf.mxu0
        %v1061 = vadd.f32 0.0, %v1060
        %v1062 = vpop.f32.mrf.mxu0
        %1063 = vdwg.mxu0
        %v1064 = vpack.c.bf16 %v1004, %v1004
        %v1065 = vpack.c.bf16 %v1023, %v1023
        %v1066 = vpack.c.bf16 %v1042, %v1042
        %v1067 = vpack.c.bf16 %v1061, %v1061
        %v1070 = vpack.i.b16 %v1065, %v1064
        %v1071 = vshrl.u32 %v1064, 16
        %v1072 = vshrl.u32 %v1065, 16
        %v1073 = vpack.i.b16 %v1072, %v1071
        %v1076 = vpack.i.b16 %v1067, %v1066
        %v1077 = vshrl.u32 %v1066, 16
        %v1078 = vshrl.u32 %v1067, 16
        %v1079 = vpack.i.b16 %v1078, %v1077
        %v1082 = vunpack.c.l.s4 1983009808
        %v1083 = vunpack.c.0.s8 %v1082
        %v1084 = vperm.slane %v1070, %v1083
        %v1087 = vunpack.c.l.s4 1983009808
        %v1088 = vunpack.c.0.s8 %v1087
        %v1089 = vperm.slane %v1076, %v1088
        %v1090 = vrot.slane %v1089, 4
        %v1091 = vsel %vm515, %v1090, %v1084
        %v1092 = vrot.slane %v1084, 4
        %v1093 = vsel %vm515, %v1089, %v1092
        %v1095 = vunpack.c.l.s4 1934713408
        %v1096 = vunpack.c.0.s8 %v1095
        %v1097 = vperm.slane %v1091, %v1096
        %v1099 = vunpack.c.l.s4 1934713408
        %v1100 = vunpack.c.0.s8 %v1099
        %v1101 = vperm.slane %v1093, %v1100
        %v1102 = vrot.slane %v1097, 4
        %v1103 = vsel %vm515, 0, %v1102
        %v1104 = vrot.slane %v1101, 4
        %v1105 = vsel %vm515, 0, %v1104
        %v1108 = vunpack.c.l.s4 1983009808
        %v1109 = vunpack.c.0.s8 %v1108
        %v1110 = vperm.slane %v1073, %v1109
        %v1113 = vunpack.c.l.s4 1983009808
        %v1114 = vunpack.c.0.s8 %v1113
        %v1115 = vperm.slane %v1079, %v1114
        %v1116 = vrot.slane %v1115, 4
        %v1117 = vsel %vm515, %v1116, %v1110
        %v1118 = vrot.slane %v1110, 4
        %v1119 = vsel %vm515, %v1115, %v1118
        %v1121 = vunpack.c.l.s4 1934713408
        %v1122 = vunpack.c.0.s8 %v1121
        %v1123 = vperm.slane %v1117, %v1122
        %v1125 = vunpack.c.l.s4 1934713408
        %v1126 = vunpack.c.0.s8 %v1125
        %v1127 = vperm.slane %v1119, %v1126
        %v1128 = vrot.slane %v1123, 4
        %v1129 = vsel %vm515, 0, %v1128
        %v1130 = vrot.slane %v1127, 4
        %v1131 = vsel %vm515, 0, %v1130
        %v1132 = vsel %vm515, %v1104, %v1097
        %v1134 = vunpack.c.l.s4 1983009808
        %v1135 = vunpack.c.0.s8 %v1134
        %v1136 = vperm.slane %v1132, %v1135
        %v1137 = vrot.slane %v1105, 4
        %v1138 = vsel %vm515, %v1137, %v1103
        %v1140 = vunpack.c.l.s4 1983009808
        %v1141 = vunpack.c.0.s8 %v1140
        %v1142 = vperm.slane %v1138, %v1141
        %v1143 = vrot.slane %v1142, 4
        %v1144 = vsel %vm515, %v1143, %v1136
        %v1146 = vunpack.c.l.s4 1934713408
        %v1147 = vunpack.c.0.s8 %v1146
        %v1148 = vperm.slane %v1144, %v1147
        %v1149 = vrot.slane %v1148, 4
        %v1150 = vsel %vm515, 0, %v1149
        %v1151 = vsel %vm515, %v1130, %v1123
        %v1153 = vunpack.c.l.s4 1983009808
        %v1154 = vunpack.c.0.s8 %v1153
        %v1155 = vperm.slane %v1151, %v1154
        %v1156 = vrot.slane %v1131, 4
        %v1157 = vsel %vm515, %v1156, %v1129
        %v1159 = vunpack.c.l.s4 1983009808
        %v1160 = vunpack.c.0.s8 %v1159
        %v1161 = vperm.slane %v1157, %v1160
        %v1162 = vrot.slane %v1161, 4
        %v1163 = vsel %vm515, %v1162, %v1155
        %v1165 = vunpack.c.l.s4 1934713408
        %v1166 = vunpack.c.0.s8 %v1165
        %v1167 = vperm.slane %v1163, %v1166
        %v1168 = vrot.slane %v1167, 4
        %v1169 = vsel %vm515, 0, %v1168
        %v1172 = vpack.i.b16 %v1167, %v1148
        %v1173 = vshrl.u32 %v1148, 16
        %v1174 = vshrl.u32 %v1167, 16
        %v1175 = vpack.i.b16 %v1174, %v1173
        %v1178 = vpack.i.b16 %v1169, %v1150
        %v1179 = vshrl.u32 %v1150, 16
        %v1180 = vshrl.u32 %v1169, 16
        %v1181 = vpack.i.b16 %v1180, %v1179
        %v1182 = vunpack.c.l.b16 %v1175
        %v1183 = vpack.c.b16 %v1182, %v1182
        %1184 = vrot.lane.b32.xlu0 %v1183, 8
        %v1185 = vpop.permute.xlu0 %1184
        %v1186 = vunpack.c.l.b16 %v1178
        %v1187 = vpack.c.b16 %v1186, %v1186
        %1188 = vrot.lane.b32.xlu0 %v1187, 16
        %v1189 = vpop.permute.xlu0 %1188
        %v1190 = vunpack.c.l.b16 %v1181
        %v1191 = vpack.c.b16 %v1190, %v1190
        %1192 = vrot.lane.b32.xlu0 %v1191, 24
        %v1193 = vpop.permute.xlu0 %1192
        %v1196 = vsel %vm851, %v1172, %v1185
        %vm1197 = vcmask 130048
        %v1199 = vsel %vm1197, %v1196, %v1189
        %vm1200 = vcmask 195584
        %v1202 = vsel %vm1200, %v1199, %v1193
        %v1203 = vld [vmem:[%s4] sm:$0xf]
        %v1204 = vld [vmem:[%s4 + $0x4] sm:$0xf]
        %v1205 = vld [vmem:[%s4 + $0x8] sm:$0xf]
        %v1206 = vld [vmem:[%s4 + $0xc] sm:$0xf]
        %v1207 = vld [vmem:[%s5] sm:$0x1]
        %v1209 = vperm.slane %v1207, 0
        %v1215 = vunpack.c.l.b16 %v1203
        %v1216 = vunpack.c.l.b16 %v1204
        %v1217 = vunpack.c.l.b16 %v1205
        %v1218 = vunpack.c.l.b16 %v1206
        %v1219 = vpack.c.b16 %v1216, %v1215
        %v1220 = vpack.c.b16 %v1218, %v1217
        %v1223 = vsel %vm413, %v1202, 0
        %1225 = vmatpush.bf16.msra.mxu0 0
        %1226 = vmatpush.bf16.msra.mxu0 0
        %1227 = vmatpush.bf16.msra.mxu0 0
        %1228 = vmatpush.bf16.msra.mxu0 0
        %1229 = vmatpush.bf16.msra.mxu0 0
        %1230 = vmatpush.bf16.msra.mxu0 0
        %1231 = vmatpush.bf16.msra.mxu0 %v1220
        %1232 = vmatpush.bf16.msra.mxu0 %v1219
        %1233 = vmatmul.bf16.gmra.mxu0 %v1223
        %v1234 = vpop.f32.mrf.mxu0
        %v1235 = vadd.f32 %v1209, %v1234
        %v1236 = vpop.f32.mrf.mxu0
        %1237 = vdwg.mxu0
        %v1238 = vadd.f32 %v410, %v1235
        %v1239 = vld [vmem:[%s6] sm:$0x1]
        %v1240 = vld [vmem:[%s7] sm:$0x1]
        %v1241 = vsel %vm413, %v1238, 0.0
        %1242 = vadd.xlane.f32.xlu0 %v1241
        %v1243 = vpop.xlane.xlu0 %1242
        %v1244 = vmul.f32 %v1243, %v423
        %v1245 = vsub.f32 %v1238, %v1244
        %v1246 = vmul.f32 %v1245, %v1245
        %v1247 = vsel %vm413, %v1246, 0.0
        %1248 = vadd.xlane.f32.xlu0 %v1247
        %v1249 = vpop.xlane.xlu0 %1248
        %v1250 = vmul.f32 %v1249, %v423
        %v1251 = vadd.f32 %v1250, 1e-05
        %v1252 = vrsqrt.pop %v1251
        %v1253 = vmul.f32 %v1252, %v1251
        %v1254 = vmul.f32 %v1253, %v1252
        %v1255 = vmul.f32 0.5, %v1254
        %v1256 = vsub.f32 1.5, %v1255
        %v1257 = vmul.f32 %v1252, %v1256
        %vm1258 = vweird.f32 %v1251
        %vm1259 = vweird.f32 %v1252
        %vm1260 = vmor %vm1258, %vm1259
        %v1261 = vsel %vm1260, %v1252, %v1257
        %v1262 = vmul.f32 %v1245, %v1261
        %v1264 = vperm.slane %v1239, 0
        %v1266 = vmul.f32 %v1262, %v1264
        %v1268 = vperm.slane %v1240, 0
        %v1270 = vadd.f32 %v1266, %v1268
        %v1271 = vpack.c.bf16 %v1270, %v1270
        %v1272 = vld [vmem:[%s8] sm:$0xf]
        %v1273 = vld [vmem:[%s8 + $0x4] sm:$0xf]
        %v1274 = vld [vmem:[%s8 + $0x8] sm:$0xf]
        %v1275 = vld [vmem:[%s8 + $0xc] sm:$0xf]
        %v1276 = vld [vmem:[%s9] sm:$0x1]
        %v1278 = vperm.slane %v1276, 0
        %v1284 = vunpack.c.l.b16 %v1272
        %v1285 = vunpack.c.l.b16 %v1273
        %v1286 = vunpack.c.l.b16 %v1274
        %v1287 = vunpack.c.l.b16 %v1275
        %v1288 = vpack.c.b16 %v1285, %v1284
        %v1289 = vpack.c.b16 %v1287, %v1286
        %v1293 = vsel %vm413, %v1271, 0
        %1295 = vmatpush.bf16.msra.mxu0 0
        %1296 = vmatpush.bf16.msra.mxu0 0
        %1297 = vmatpush.bf16.msra.mxu0 0
        %1298 = vmatpush.bf16.msra.mxu0 0
        %1299 = vmatpush.bf16.msra.mxu0 0
        %1300 = vmatpush.bf16.msra.mxu0 0
        %1301 = vmatpush.bf16.msra.mxu0 %v1289
        %1302 = vmatpush.bf16.msra.mxu0 %v1288
        %1303 = vmatmul.bf16.gmra.mxu0 %v1293
        %v1304 = vpop.f32.mrf.mxu0
        %v1305 = vadd.f32 %v1278, %v1304
        %v1306 = vpop.f32.mrf.mxu0
        %1307 = vdwg.mxu0
        %v1308 = vmax.f32 %v1305, 0.0
        %v1309 = vpack.c.bf16 %v1308, %v1308
        %v1310 = vld [vmem:[%s10] sm:$0xf]
        %v1311 = vld [vmem:[%s10 + $0x4] sm:$0xf]
        %v1312 = vld [vmem:[%s10 + $0x8] sm:$0xf]
        %v1313 = vld [vmem:[%s10 + $0xc] sm:$0xf]
        %v1314 = vld [vmem:[%s10 + $0x10] sm:$0xf]
        %v1315 = vld [vmem:[%s10 + $0x14] sm:$0xf]
        %v1316 = vld [vmem:[%s10 + $0x18] sm:$0xf]
        %v1317 = vld [vmem:[%s10 + $0x1c] sm:$0xf]
        %v1318 = vld [vmem:[%s10 + $0x20] sm:$0xf]
        %v1319 = vld [vmem:[%s10 + $0x24] sm:$0xf]
        %v1320 = vld [vmem:[%s10 + $0x28] sm:$0xf]
        %v1321 = vld [vmem:[%s10 + $0x2c] sm:$0xf]
        %v1322 = vld [vmem:[%s10 + $0x30] sm:$0xf]
        %v1323 = vld [vmem:[%s10 + $0x34] sm:$0xf]
        %v1324 = vld [vmem:[%s10 + $0x38] sm:$0xf]
        %v1325 = vld [vmem:[%s10 + $0x3c] sm:$0xf]
        %v1326 = vld [vmem:[%s11] sm:$0x1]
        %v1328 = vperm.slane %v1326, 0
        %v1346 = vunpack.c.l.b16 %v1310
        %v1347 = vunpack.c.l.b16 %v1311
        %v1348 = vunpack.c.l.b16 %v1312
        %v1349 = vunpack.c.l.b16 %v1313
        %v1350 = vunpack.c.l.b16 %v1314
        %v1351 = vunpack.c.l.b16 %v1315
        %v1352 = vunpack.c.l.b16 %v1316
        %v1353 = vunpack.c.l.b16 %v1317
        %v1354 = vunpack.c.l.b16 %v1318
        %v1355 = vunpack.c.l.b16 %v1319
        %v1356 = vunpack.c.l.b16 %v1320
        %v1357 = vunpack.c.l.b16 %v1321
        %v1358 = vunpack.c.l.b16 %v1322
        %v1359 = vunpack.c.l.b16 %v1323
        %v1360 = vunpack.c.l.b16 %v1324
        %v1361 = vunpack.c.l.b16 %v1325
        %v1362 = vpack.c.b16 %v1347, %v1346
        %v1363 = vpack.c.b16 %v1349, %v1348
        %v1364 = vpack.c.b16 %v1351, %v1350
        %v1365 = vpack.c.b16 %v1353, %v1352
        %v1366 = vpack.c.b16 %v1355, %v1354
        %v1367 = vpack.c.b16 %v1357, %v1356
        %v1368 = vpack.c.b16 %v1359, %v1358
        %v1369 = vpack.c.b16 %v1361, %v1360
        %1378 = vmatpush.bf16.msra.mxu0 %v1369
        %1379 = vmatpush.bf16.msra.mxu0 %v1368
        %1380 = vmatpush.bf16.msra.mxu0 %v1367
        %1381 = vmatpush.bf16.msra.mxu0 %v1366
        %1382 = vmatpush.bf16.msra.mxu0 %v1365
        %1383 = vmatpush.bf16.msra.mxu0 %v1364
        %1384 = vmatpush.bf16.msra.mxu0 %v1363
        %1385 = vmatpush.bf16.msra.mxu0 %v1362
        %1386 = vmatmul.bf16.gmra.mxu0 %v1309
        %v1387 = vpop.f32.mrf.mxu0
        %v1388 = vadd.f32 %v1328, %v1387
        %v1389 = vpop.f32.mrf.mxu0
        %1390 = vdwg.mxu0
        %v1391 = vadd.f32 %v1238, %v1388
        %1392 = vst.msk [vmem:[%s404] sm:$0xff] %vm413, %v1391
        %s1393 = sand.u32 %s291, 1
        %s1394 = scalar_lea.sflag [#allocation3], %s1393
        %s1395 = sand.u32 %s291, 1
        %s1396 = smul.addr %s1395, 8
        %s1397 = scalar_lea.vmem [#allocation2], %s1396
        // Predicated region
        $region69: #{tpu_custom_call.1} parent=67 // pred_check
          %p1398 = pneg %p301
        $region70: #{tpu_custom_call.1} parent=67 // pred_check_branch
          %1400 = sbr.rel (%p1398) target = $region72
        $region71: #{tpu_custom_call.1} parent=67 // pred_region
          %1402 = vsyncadd %s1394, 0
          %s1403 = smul.addr %s26, 8
          %s1404 = scalar_lea.hbm %s12, %s1403
          %s1406 = sshll.u32 %s1397, 4
          %s1407 = int_to_ptr.vmem [resolvable:$true] %s1406
          %s1408 = sshll.u32 %s1404, 4
          %s1409 = int_to_ptr.hbm [resolvable:$true] %s1408
          %1411 = dma.vmem_to_hbm [thread:$0]  %s1407, 128, %s1409, %s1394
        $region72: #{tpu_custom_call.1} parent=67 // pred_fallthru
          _
      $region68: #{tpu_custom_call.1} parent=5 // pred_fallthru
        _
      %p1412 = scmp.le.s32.totalorder 2, %s21
      // Predicated region
      $region73: #{tpu_custom_call.1} parent=5 // pred_check
        %p1413 = pneg %p1412
      $region74: #{tpu_custom_call.1} parent=5 // pred_check_branch
        %1415 = sbr.rel (%p1413) target = $region76
      $region75: #{tpu_custom_call.1} parent=5 // pred_region
        %s1416 = ssub.s32 %s21, 2
        // Predicated region
        $region77: #{tpu_custom_call.1} parent=75 // pred_check
          %p1417 = pneg %p307
        $region78: #{tpu_custom_call.1} parent=75 // pred_check_branch
          %1419 = sbr.rel (%p1417) target = $region80
        $region79: #{tpu_custom_call.1} parent=75 // pred_region
          %s1420 = sand.u32 %s292, 1
          %s1421 = scalar_lea.sflag [#allocation3], %s1420
          %s1422 = sand.u32 %s292, 1
          %s1423 = smul.addr %s1422, 8
          %s1424 = scalar_lea.vmem [#allocation2], %s1423
          %1426 = dma.done %s1421, 128
        $region80: #{tpu_custom_call.1} parent=75 // pred_fallthru
          _
      $region76: #{tpu_custom_call.1} parent=5 // pred_fallthru
        _
    $region6: #{tpu_custom_call.1} parent=1 // loop_footer
      %s25 = sadd.s32 1, %s21
    $region7: #{tpu_custom_call.1} parent=1 // loop_footer_branch
      %20 = sbr.rel target = $region3
    $region8: #{tpu_custom_call.1} parent=1 // loop_exit
      _
    %1427 = vsyncpa [#allocation3], 1
    %s1428 = scalar_lea.sflag [#allocation3], 1
    %1429 = vsyncpa %s1428, 1

</llo_original>
